<compile_context>
chip_gen: v5e
topology: v5e:2x2
jax: 0.10.0
libtpu: 0.0.40
codegen_flags: <defaults>
</compile_context>

<pallas_src>
import functools

import jax
import jax.numpy as jnp
from jax.experimental import pallas as pl
from jax.experimental.pallas import tpu as pltpu


def _round_up(n: int, m: int) -> int:
    return (n + m - 1) // m * m


def _vq_kernel(x_ref, cbd_ref, cbg_ref, xq_ref, idx_ref, sse_ref, aug_ref):
    """One (batch b, token-tile i) grid point.

    x_ref   : (D, TN) f32      input tokens (lane axis = tokens)
    cbd_ref : (K, D+16)        [-2*codebook | ||c||^2 | zeros], resident (f32 or bf16)
    cbg_ref : (K, D)  f32      codebook for the one-hot gather, resident
    xq_ref  : (D, TN) f32      quantized tokens (exact codebook rows)
    idx_ref : (1, TN) i32      code indices
    sse_ref : (1, TN) f32      per-token ||x - c_idx||^2 (reduced in the wrapper)
    aug_ref : (D+16, TN)       VMEM scratch holding [x ; 1...] in the distance dtype
    """
    D, TN = x_ref.shape
    K = cbd_ref.shape[0]
    Daug = aug_ref.shape[0]

    xT = x_ref[...]                                               # (D, TN) f32

    # ---- distances straight off the MXU: dist = [-2c | csq | 0] @ [x ; 1] ----
    aug_ref[pl.ds(0, D), :] = xT.astype(aug_ref.dtype)
    aug_ref[pl.ds(D, Daug - D), :] = jnp.ones((Daug - D, TN), aug_ref.dtype)
    dist = jax.lax.dot_general(
        cbd_ref[...], aug_ref[...], (((1,), (0,)), ((), ())),
        preferred_element_type=jnp.float32)                       # (K, TN) = ||c||^2 - 2<c,x>

    # ---- first-index argmin (two sublane reduces; masked iota reused) --------
    k_iota = jax.lax.broadcasted_iota(jnp.int32, (K, TN), 0)
    min_d = jnp.min(dist, axis=0, keepdims=True)                  # (1, TN)
    masked_iota = jnp.where(dist <= min_d, k_iota, K)             # (K, TN) i32
    idx = jnp.min(masked_iota, axis=0, keepdims=True)             # (1, TN) first argmin
    one_hot = (masked_iota == idx).astype(jnp.float32)            # exact one-hot

    # ---- gather the selected rows on the MXU (f32 multi-pass -> exact rows) --
    xqT = jax.lax.dot_general(
        cbg_ref[...], one_hot, (((0,), (0,)), ((), ())),
        preferred_element_type=jnp.float32)                       # (D, TN)

    xq_ref[...] = xqT
    idx_ref[...] = idx
    # ||x - c_idx||^2 = ||x||^2 + (||c||^2 - 2<c,x>)|_argmin = ||x||^2 + min_d
    x_sq = jnp.sum(xT * xT, axis=0, keepdims=True)                # (1, TN)
    sse_ref[...] = jnp.maximum(x_sq + min_d, 0.0)


def _vq_pallas(x3, cb_dist, cb_gather, *, tile):
    """x3: (B, D, HWp) f32 (HWp % tile == 0); cb_dist: (K, D+16); cb_gather: (K, D)."""
    B, D, HWp = x3.shape
    K, Daug = cb_dist.shape
    grid = (B, HWp // tile)
    return pl.pallas_call(
        _vq_kernel,
        out_shape=(
            jax.ShapeDtypeStruct((B, D, HWp), jnp.float32),   # x_q (native layout)
            jax.ShapeDtypeStruct((B, 1, HWp), jnp.int32),     # code indices
            jax.ShapeDtypeStruct((B, 1, HWp), jnp.float32),   # per-token SSE
        ),
        grid_spec=pltpu.PrefetchScalarGridSpec(
            num_scalar_prefetch=0,
            grid=grid,
            in_specs=[
                pl.BlockSpec((None, D, tile), lambda b, i: (b, 0, i)),  # x tile (lane-dense)
                pl.BlockSpec((K, Daug), lambda b, i: (0, 0)),           # [-2c|csq|0] resident
                pl.BlockSpec((K, D), lambda b, i: (0, 0)),              # gather codebook resident
            ],
            out_specs=[
                pl.BlockSpec((None, D, tile), lambda b, i: (b, 0, i)),
                pl.BlockSpec((None, 1, tile), lambda b, i: (b, 0, i)),
                pl.BlockSpec((None, 1, tile), lambda b, i: (b, 0, i)),
            ],
            scratch_shapes=[pltpu.VMEM((Daug, tile), cb_dist.dtype)],   # [x ; 1...] staging
        ),
        compiler_params=pltpu.CompilerParams(
            dimension_semantics=("parallel", "parallel"),   # megacore-shardable, no carries
            vmem_limit_bytes=64 * 1024 * 1024),
    )(x3, cb_dist, cb_gather)


@functools.partial(jax.jit, static_argnames=("beta", "tile_hw", "use_bf16_dist"))
def mask_vector_quantize(x, codebook_weight, codebook_mask=None, *,
                         beta=0.25, tile_hw=2048, use_bf16_dist=True):
    """Forward of MaskVectorQuantize (accept_image_fmap=True, eval mode).

    x: (B, C, H, W) f32 with C == codebook_dim.
    codebook_weight: (codebook_size + 1, codebook_dim); last row is padding_idx.
    Returns (x_q (B,C,H,W) f32, loss scalar, (None, None, x_code (B,H,W) i32)).
    """
    B, C, H, W = x.shape
    HW = H * W

    codebook = codebook_weight[:-1]                                    # (K, D)
    K, D = codebook.shape
    c_sq = jnp.sum(codebook * codebook, axis=1, keepdims=True)         # (K, 1)
    dist_dtype = jnp.bfloat16 if use_bf16_dist else jnp.float32
    # [-2c | csq | zeros(15)] so the csq add is folded into the MXU matmul;
    # the bf16 cast is hoisted here (never re-done per grid step).
    cb_dist = jnp.concatenate(
        [codebook * (-2.0), c_sq, jnp.zeros((K, 15), codebook.dtype)],
        axis=1).astype(dist_dtype)                                      # (K, D+16)

    # Native layout (B, C, H*W): no B<->C transpose before or after the kernel.
    x3 = x.reshape(B, C, HW)

    tile = min(tile_hw, _round_up(HW, 128))
    if B == 1 and tile >= 256 and _round_up(HW, 128) <= tile:
        # Keep >= 2 grid steps so both v7x TensorCores get work.
        tile = max(128, _round_up((HW + 1) // 2, 128))
    HWp = _round_up(HW, tile)
    x3p = x3 if HWp == HW else jnp.pad(x3, ((0, 0), (0, 0), (0, HWp - HW)))

    xq_p, idx_p, sse_p = _vq_pallas(x3p, cb_dist, codebook, tile=tile)

    x_q = xq_p[:, :, :HW].reshape(B, C, H, W)
    x_code = idx_p[:, 0, :HW].reshape(B, H, W)

    if codebook_mask is None:
        # Forward value of beta*mean((xq.detach()-x)^2) + mean((xq-x.detach())^2).
        sse = jnp.sum(sse_p[:, 0, :HW])          # padded token columns excluded
        loss = (1.0 + beta) * sse / (B * HW * C)
    else:
        # torch: both terms are means over the full broadcasted tensor, then the
        # loss is scaled by mean(codebook_mask).  Same pairing in native layout.
        sq = (x_q - x) ** 2                                            # (B, C, H, W)
        if codebook_mask.ndim == 4:
            m = codebook_mask                                          # (B, c, H, W)
        else:
            m = codebook_mask.reshape(B, 1, H, W)
        loss = (1.0 + beta) * jnp.mean(sq * m) * jnp.mean(codebook_mask)

    # Straight-through estimator: forward value of x + (x_q - x).detach() is x_q.
    return x_q, loss, (None, None, x_code)


if __name__ == "__main__":
    # Small shapes consistent with the module (codebook_dim = C, codebook_size = K).
    B, C, H, W = 2, 32, 16, 16
    codebook_size = 256

    key = jax.random.PRNGKey(0)
    kx, kw, km = jax.random.split(key, 3)
    x = jax.random.normal(kx, (B, C, H, W), dtype=jnp.float32)
    # nn.Embedding(codebook_size + 1, dim) with .uniform_(-1/K, 1/K).
    codebook_weight = jax.random.uniform(
        kw, (codebook_size + 1, C), dtype=jnp.float32,
        minval=-1.0 / codebook_size, maxval=1.0 / codebook_size)

    # --- default fast path (bf16 distances) ----------------------------------
    x_q, loss, (_, _, x_code) = mask_vector_quantize(x, codebook_weight, beta=0.25)
    jax.block_until_ready((x_q, loss, x_code))

    assert x_q.shape == (B, C, H, W) and x_q.dtype == jnp.float32
    assert x_code.shape == (B, H, W) and x_code.dtype == jnp.int32
    assert loss.shape == () and bool(jnp.isfinite(loss))
    assert int(x_code.min()) >= 0 and int(x_code.max()) < codebook_size

    cb = codebook_weight[:-1]
    # x_q must be exactly the selected codebook rows.
    gathered = jnp.transpose(cb[x_code], (0, 3, 1, 2))
    assert jnp.allclose(x_q, gathered, atol=1e-5)

    # Selected codes must be (near-)optimal and the loss must match a pure-JAX
    # reference (bf16 distances may flip indices only at near-ties).
    x_tok = jnp.transpose(x, (0, 2, 3, 1)).reshape(-1, C)                 # (N, D)
    d_all = jnp.sum((x_tok[:, None, :] - cb[None, :, :]) ** 2, axis=-1)   # (N, K)
    d_opt = jnp.min(d_all, axis=-1)
    d_sel = jnp.sum((x_tok - cb[x_code.reshape(-1)]) ** 2, axis=-1)
    assert jnp.allclose(d_sel, d_opt, rtol=1e-3, atol=1e-3)
    loss_ref = (1.0 + 0.25) * jnp.sum(d_opt) / x.size
    assert jnp.allclose(loss, loss_ref, rtol=1e-3)

    # --- exact path (f32 distances) ------------------------------------------
    x_q2, loss2, (_, _, code2) = mask_vector_quantize(
        x, codebook_weight, beta=0.25, use_bf16_dist=False)
    jax.block_until_ready((x_q2, loss2, code2))
    assert jnp.allclose(x_q2, jnp.transpose(cb[code2], (0, 3, 1, 2)), atol=1e-5)
    d_sel2 = jnp.sum((x_tok - cb[code2.reshape(-1)]) ** 2, axis=-1)
    assert jnp.allclose(d_sel2, d_opt, rtol=1e-5, atol=1e-5)
    assert jnp.allclose(loss2, loss_ref, rtol=1e-4)

    # --- masked-loss branch ----------------------------------------------------
    mask = (jax.random.uniform(km, (B, 1, H, W)) > 0.5).astype(jnp.float32)
    x_qm, loss_m, _ = mask_vector_quantize(x, codebook_weight, mask, beta=0.25)
    jax.block_until_ready(loss_m)
    loss_m_ref = (1.0 + 0.25) * jnp.mean((x_qm - x) ** 2 * mask) * jnp.mean(mask)
    assert jnp.allclose(loss_m, loss_m_ref, rtol=1e-5, atol=1e-7)

    print("KERNEL_OK")
</pallas_src>

<mosaic_0001>
module attributes {stable_mosaic.version = 11 : i64} {
  func.func @_vq_kernel(%arg0: i32, %arg1: i32, %arg2: memref<1x32x256xf32, #tpu.memory_space<vmem>>, %arg3: memref<256x48xbf16, #tpu.memory_space<vmem>>, %arg4: memref<256x32xf32, #tpu.memory_space<vmem>>, %arg5: memref<1x32x256xf32, #tpu.memory_space<vmem>>, %arg6: memref<1x1x256xi32, #tpu.memory_space<vmem>>, %arg7: memref<1x1x256xf32, #tpu.memory_space<vmem>>, %arg8: memref<48x256xbf16, #tpu.memory_space<vmem>>) attributes {dimension_semantics = [#tpu.dimension_semantics<parallel>, #tpu.dimension_semantics<parallel>], iteration_bounds = array<i64: 2, 1>, scalar_prefetch = 0 : i64, scratch_operands = 1 : i64, tpu.core_type = #tpu.core_type<tc>, window_params = [{transform_indices = @transform_0, window_bounds = array<i64: 1, 32, 256>}, {pipeline_mode = #tpu.pipeline_mode<synchronous>, transform_indices = @transform_1, window_bounds = array<i64: 256, 48>}, {pipeline_mode = #tpu.pipeline_mode<synchronous>, transform_indices = @transform_2, window_bounds = array<i64: 256, 32>}, {transform_indices = @transform_3, window_bounds = array<i64: 1, 32, 256>}, {transform_indices = @transform_4, window_bounds = array<i64: 1, 1, 256>}, {transform_indices = @transform_5, window_bounds = array<i64: 1, 1, 256>}]} {
    %c0 = arith.constant 0 : index
    %c0_0 = arith.constant 0 : index
    %c0_1 = arith.constant 0 : index
    %0 = vector.load %arg2[%c0, %c0_0, %c0_1] : memref<1x32x256xf32, #tpu.memory_space<vmem>>, vector<1x32x256xf32>
    %1 = vector.shape_cast %0 : vector<1x32x256xf32> to vector<32x256xf32>
    %2 = arith.truncf %1 : vector<32x256xf32> to vector<32x256xbf16>
    %c0_2 = arith.constant 0 : index
    %c0_3 = arith.constant 0 : index
    %3 = vector.load %arg8[%c0_2, %c0_3] : memref<48x256xbf16, #tpu.memory_space<vmem>>, vector<32x256xbf16>
    tpu.vector_store %arg8[%c0_2, %c0_3], %2 {strides = array<i32>} : memref<48x256xbf16, #tpu.memory_space<vmem>>, vector<32x256xbf16>,
    %cst = arith.constant 1.000000e+00 : bf16
    %4 = vector.broadcast %cst : bf16 to vector<16x256xbf16>
    %c32 = arith.constant 32 : index
    %c0_4 = arith.constant 0 : index
    %5 = vector.load %arg8[%c32, %c0_4] : memref<48x256xbf16, #tpu.memory_space<vmem>>, vector<16x256xbf16>
    tpu.vector_store %arg8[%c32, %c0_4], %4 {strides = array<i32>} : memref<48x256xbf16, #tpu.memory_space<vmem>>, vector<16x256xbf16>,
    %c0_5 = arith.constant 0 : index
    %c0_6 = arith.constant 0 : index
    %6 = vector.load %arg3[%c0_5, %c0_6] : memref<256x48xbf16, #tpu.memory_space<vmem>>, vector<256x48xbf16>
    %c0_7 = arith.constant 0 : index
    %c0_8 = arith.constant 0 : index
    %7 = vector.load %arg8[%c0_7, %c0_8] : memref<48x256xbf16, #tpu.memory_space<vmem>>, vector<48x256xbf16>
    %cst_9 = arith.constant dense<0.000000e+00> : vector<256x256xf32>
    %8 = tpu.matmul %6, %7, %cst_9 {dimension_numbers = #tpu.dot_dimension_numbers<[1], [0], [0], [1], [0, 0, 1, 1], [], []>} : vector<256x48xbf16>, vector<48x256xbf16>, vector<256x256xf32> -> vector<256x256xf32>
    %9 = tpu.iota {dimensions = array<i32: 0>} : vector<256x256xi32>
    %cst_10 = arith.constant dense<0x7F800000> : vector<256xf32>
    %10 = vector.multi_reduction <minimumf>, %8, %cst_10 [0] : vector<256x256xf32> to vector<256xf32>
    %11 = vector.shape_cast %10 : vector<256xf32> to vector<1x256xf32>
    %12 = vector.broadcast %11 : vector<1x256xf32> to vector<256x256xf32>
    %13 = arith.cmpf ole, %8, %12 : vector<256x256xf32>
    %c256_i32 = arith.constant 256 : i32
    %14 = vector.broadcast %c256_i32 : i32 to vector<256x256xi32>
    %15 = arith.select %13, %9, %14 : vector<256x256xi1>, vector<256x256xi32>
    %cst_11 = arith.constant dense<2147483647> : vector<256xi32>
    %16 = vector.multi_reduction <minsi>, %15, %cst_11 [0] : vector<256x256xi32> to vector<256xi32>
    %17 = vector.shape_cast %16 : vector<256xi32> to vector<1x256xi32>
    %18 = vector.broadcast %17 : vector<1x256xi32> to vector<256x256xi32>
    %19 = arith.cmpi eq, %15, %18 : vector<256x256xi32>
    %20 = arith.extui %19 : vector<256x256xi1> to vector<256x256xi32>
    %21 = arith.sitofp %20 : vector<256x256xi32> to vector<256x256xf32>
    %c0_12 = arith.constant 0 : index
    %c0_13 = arith.constant 0 : index
    %22 = vector.load %arg4[%c0_12, %c0_13] : memref<256x32xf32, #tpu.memory_space<vmem>>, vector<256x32xf32>
    %cst_14 = arith.constant dense<0.000000e+00> : vector<32x256xf32>
    %23 = tpu.matmul %22, %21, %cst_14 {dimension_numbers = #tpu.dot_dimension_numbers<[0], [0], [1], [1], [0, 1, 1, 1], [], []>} : vector<256x32xf32>, vector<256x256xf32>, vector<32x256xf32> -> vector<32x256xf32>
    %c0_15 = arith.constant 0 : index
    %c0_16 = arith.constant 0 : index
    %c0_17 = arith.constant 0 : index
    %24 = vector.load %arg5[%c0_15, %c0_16, %c0_17] : memref<1x32x256xf32, #tpu.memory_space<vmem>>, vector<1x32x256xf32>
    %25 = vector.shape_cast %24 : vector<1x32x256xf32> to vector<32x256xf32>
    %26 = vector.shape_cast %23 : vector<32x256xf32> to vector<1x32x256xf32>
    tpu.vector_store %arg5[%c0_15, %c0_16, %c0_17], %26 {strides = array<i32>} : memref<1x32x256xf32, #tpu.memory_space<vmem>>, vector<1x32x256xf32>,
    %c0_18 = arith.constant 0 : index
    %c0_19 = arith.constant 0 : index
    %c0_20 = arith.constant 0 : index
    %27 = vector.load %arg6[%c0_18, %c0_19, %c0_20] : memref<1x1x256xi32, #tpu.memory_space<vmem>>, vector<1x1x256xi32>
    %28 = vector.shape_cast %27 : vector<1x1x256xi32> to vector<1x256xi32>
    %29 = vector.shape_cast %17 : vector<1x256xi32> to vector<1x1x256xi32>
    tpu.vector_store %arg6[%c0_18, %c0_19, %c0_20], %29 {strides = array<i32>} : memref<1x1x256xi32, #tpu.memory_space<vmem>>, vector<1x1x256xi32>,
    %30 = arith.mulf %1, %1 : vector<32x256xf32>
    %cst_21 = arith.constant dense<0.000000e+00> : vector<256xf32>
    %31 = vector.multi_reduction <add>, %30, %cst_21 [0] : vector<32x256xf32> to vector<256xf32>
    %32 = vector.shape_cast %31 : vector<256xf32> to vector<1x256xf32>
    %33 = arith.addf %32, %11 : vector<1x256xf32>
    %cst_22 = arith.constant 0.000000e+00 : f32
    %34 = vector.broadcast %cst_22 : f32 to vector<1x256xf32>
    %35 = arith.maximumf %33, %34 : vector<1x256xf32>
    %c0_23 = arith.constant 0 : index
    %c0_24 = arith.constant 0 : index
    %c0_25 = arith.constant 0 : index
    %36 = vector.load %arg7[%c0_23, %c0_24, %c0_25] : memref<1x1x256xf32, #tpu.memory_space<vmem>>, vector<1x1x256xf32>
    %37 = vector.shape_cast %36 : vector<1x1x256xf32> to vector<1x256xf32>
    %38 = vector.shape_cast %35 : vector<1x256xf32> to vector<1x1x256xf32>
    tpu.vector_store %arg7[%c0_23, %c0_24, %c0_25], %38 {strides = array<i32>} : memref<1x1x256xf32, #tpu.memory_space<vmem>>, vector<1x1x256xf32>,
    return
  }
  func.func @transform_0(%arg0: i32, %arg1: i32) -> (i32, i32, i32) {
    %c0_i32 = arith.constant 0 : i32
    %c0_i32_0 = arith.constant 0 : i32
    return %arg0, %c0_i32, %arg1 : i32, i32, i32
  }
  func.func @transform_1(%arg0: i32, %arg1: i32) -> (i32, i32) {
    %c0_i32 = arith.constant 0 : i32
    %c0_i32_0 = arith.constant 0 : i32
    %c0_i32_1 = arith.constant 0 : i32
    return %c0_i32, %c0_i32_0 : i32, i32
  }
  func.func @transform_2(%arg0: i32, %arg1: i32) -> (i32, i32) {
    %c0_i32 = arith.constant 0 : i32
    %c0_i32_0 = arith.constant 0 : i32
    %c0_i32_1 = arith.constant 0 : i32
    return %c0_i32, %c0_i32_0 : i32, i32
  }
  func.func @transform_3(%arg0: i32, %arg1: i32) -> (i32, i32, i32) {
    %c0_i32 = arith.constant 0 : i32
    %c0_i32_0 = arith.constant 0 : i32
    return %arg0, %c0_i32, %arg1 : i32, i32, i32
  }
  func.func @transform_4(%arg0: i32, %arg1: i32) -> (i32, i32, i32) {
    %c0_i32 = arith.constant 0 : i32
    %c0_i32_0 = arith.constant 0 : i32
    return %arg0, %c0_i32, %arg1 : i32, i32, i32
  }
  func.func @transform_5(%arg0: i32, %arg1: i32) -> (i32, i32, i32) {
    %c0_i32 = arith.constant 0 : i32
    %c0_i32_0 = arith.constant 0 : i32
    return %arg0, %c0_i32, %arg1 : i32, i32, i32
  }
}

</mosaic_0001>

<llo_original>
// kernel: squeeze.2
$region0: #{squeeze.2}
  %s0 = inlined_call_operand.vmem [shape: s32[2,256], index: 0, kind: input, shape index: {}]
  %s1 = inlined_call_operand.hbm [shape: s32[2,16,16], index: 1, kind: output, shape index: {}]
  $region1: #{squeeze.2} parent=0
    #allocation0 [shape = 'u8[16384]{0}', space=vmem, size = 0x4000, scoped, tag = 'operand span for operand 1']
    #allocation1 [shape = 's32[1]{0}', space=sflag, size = 0x4, scoped, tag = 'scoped memory for squeeze.2']
    #allocation2 [shape = 'u8[8192]{0}', space=vmem, size = 0x2000, scoped, tag = 'scoped mem for input reshape']
    %2 = vsyncpa [#allocation1], 0
    %s4 = ssub.s32 4, 1
    %s5 = scalar_lea.vmem %s0, 2
    %v6 = vld [vmem:[%s5] sm:%s4]
    %s7 = scalar_lea.vmem [#allocation2], 8
    %8 = vst [vmem:[%s7] sm:%s4] %v6
    %v9 = vld [vmem:[%s0] sm:%s4]
    %10 = vst [vmem:[#allocation2] sm:%s4] %v9
    %v11 = vld [vmem:[#allocation2] sm:$0x3]
    %vm12 = vcmask 130048
    %13 = vst.msk [vmem:[#allocation0] ss:$16 sm:$0x3] %vm12, %v11
    %s14 = scalar_lea.vmem [#allocation2], 8
    %v15 = vld [vmem:[%s14] sm:$0x3]
    %vm16 = vcmask 130048
    %s17 = scalar_lea.vmem [#allocation0], 8
    %18 = vst.msk [vmem:[%s17] ss:$16 sm:$0x3] %vm16, %v15
    %v19 = vld.sshfl [vmem:[#allocation2] sm:$0xff pattern:$0x99999180]
    %20 = vrot.lane.b32.xlu0 %v19, 112
    %v21 = vpop.permute.xlu0 %20
    %vm22 = vcmask 130048
    %s23 = scalar_lea.vmem [#allocation0], 1
    %24 = vst.msk [vmem:[%s23] ss:$8 sm:$0xf] %vm22, %v21
    %v25 = vld.sshfl [vmem:[#allocation2] sm:$0xff pattern:$0x99999180]
    %26 = vrot.lane.b32.xlu0 %v25, 96
    %v27 = vpop.permute.xlu0 %26
    %vm28 = vcmask 130048
    %s29 = scalar_lea.vmem [#allocation0], 2
    %30 = vst.msk [vmem:[%s29] ss:$8 sm:$0xf] %vm28, %v27
    %v31 = vld.sshfl [vmem:[#allocation2] sm:$0xff pattern:$0x99999180]
    %32 = vrot.lane.b32.xlu0 %v31, 80
    %v33 = vpop.permute.xlu0 %32
    %vm34 = vcmask 130048
    %s35 = scalar_lea.vmem [#allocation0], 3
    %36 = vst.msk [vmem:[%s35] ss:$8 sm:$0xf] %vm34, %v33
    %v37 = vld.sshfl [vmem:[#allocation2] sm:$0xff pattern:$0x99999180]
    %38 = vrot.lane.b32.xlu0 %v37, 64
    %v39 = vpop.permute.xlu0 %38
    %vm40 = vcmask 130048
    %s41 = scalar_lea.vmem [#allocation0], 4
    %42 = vst.msk [vmem:[%s41] ss:$8 sm:$0xf] %vm40, %v39
    %v43 = vld.sshfl [vmem:[#allocation2] sm:$0xff pattern:$0x99999180]
    %44 = vrot.lane.b32.xlu0 %v43, 48
    %v45 = vpop.permute.xlu0 %44
    %vm46 = vcmask 130048
    %s47 = scalar_lea.vmem [#allocation0], 5
    %48 = vst.msk [vmem:[%s47] ss:$8 sm:$0xf] %vm46, %v45
    %v49 = vld.sshfl [vmem:[#allocation2] sm:$0xff pattern:$0x99999180]
    %50 = vrot.lane.b32.xlu0 %v49, 32
    %v51 = vpop.permute.xlu0 %50
    %vm52 = vcmask 130048
    %s53 = scalar_lea.vmem [#allocation0], 6
    %54 = vst.msk [vmem:[%s53] ss:$8 sm:$0xf] %vm52, %v51
    %v55 = vld.sshfl [vmem:[#allocation2] sm:$0xff pattern:$0x99999180]
    %56 = vrot.lane.b32.xlu0 %v55, 16
    %v57 = vpop.permute.xlu0 %56
    %vm58 = vcmask 130048
    %s59 = scalar_lea.vmem [#allocation0], 7
    %60 = vst.msk [vmem:[%s59] ss:$8 sm:$0xf] %vm58, %v57
    %62 = vsyncadd [#allocation1], 0
    %s64 = sshll.u32 [#allocation0], 4
    %s65 = int_to_ptr.vmem [resolvable:$true] %s64
    %s66 = sshll.u32 %s1, 4
    %s67 = int_to_ptr.hbm [resolvable:$true] %s66
    %69 = dma.vmem_to_hbm [thread:$0]  %s65, 512, %s67, [#allocation1]
    %71 = dma.done [#allocation1], 512
    %72 = vsyncpa [#allocation1], 1

// kernel: mask_vector_quantize.1
$region0: #{mask_vector_quantize.1}
  #allocation0 [shape = 'u32[]', space=smem, size = 0x4, offset = 0x4, fixed_abs, tag = 'smem constant byte address 0x4 - core index']
  #allocation1 [shape = 'u32[72,128]{1,0:T(1,128)}', space=vmem, size = 0x9000, scoped, tag = 'internal scratch']
  #allocation2 [shape = 'bf16[48,256]{1,0:T(8,128)(2,1)}', space=vmem, size = 0x6000, scoped, tag = 'scratch operand']
  %s0 = inlined_call_operand.vmem [shape: f32[2,32,256], index: 0, kind: input, shape index: {}]
  %s1 = inlined_call_operand.vmem [shape: bf16[256,48], index: 1, kind: input, shape index: {}]
  %s2 = inlined_call_operand.vmem [shape: f32[256,32], index: 2, kind: input, shape index: {}]
  %s3 = inlined_call_operand.vmem [shape: f32[2,32,256], index: 3, kind: output, shape index: {0}]
  %s4 = inlined_call_operand.vmem [shape: s32[2,1,256], index: 4, kind: output, shape index: {1}]
  %s5 = inlined_call_operand.vmem [shape: f32[2,1,256], index: 5, kind: output, shape index: {2}]
  %6 = xla_tuple %s3, %s4, %s5
  %s7 = sld [smem:[#allocation0]]
  $region61: #{mask_vector_quantize.1} parent=0
    _
  %s9 = ssub.s32 1, %s7
  %s10 = scalar_select 0, %s9, %s7
  loop: start=0, step=1, limit=4
  $region2: #{mask_vector_quantize.1} parent=0 // loop_pre_header
    _
  $region3: #{mask_vector_quantize.1} parent=0 // loop_header
    %s12 = sphi 0, %s16
    %p13 = scmp.ge.s32.totalorder %s12, 4
    %s19 = sphi 0, %s31
    %s20 = sphi 0, %s27
    %s21 = sphi 0, %s19
    %s22 = sphi 0, %s20
    %s23 = sphi 0, %s21
    %s24 = sphi 0, %s22
    %s36 = sphi 0, %s38
    %s39 = sphi 0, %s36
    %s40 = sphi 0, %s39
    %s56 = sphi 0, %s40
    %s60 = sphi 0, %s60
    %s62 = sphi 0, %s60
    %s63 = sphi 0, %s62
    %s77 = sphi 0, %s63
    %s81 = sphi 0, %s81
    %s83 = sphi 0, %s81
    %s84 = sphi 0, %s83
    %s98 = sphi 0, %s84
    %s106 = sphi 0, %s108
    %s109 = sphi 0, %s106
    %s110 = sphi 0, %s109
    %s126 = sphi 0, %s110
    %s134 = sphi 0, %s136
    %s137 = sphi 0, %s134
    %s138 = sphi 0, %s137
    %s154 = sphi 0, %s138
    %s162 = sphi 0, %s164
    %s165 = sphi 0, %s162
    %s166 = sphi 0, %s165
    %s182 = sphi 0, %s166
  $region4: #{mask_vector_quantize.1} parent=0 // loop_header_branch
    %15 = sbr.rel (%p13) target = $region8
  $region5: #{mask_vector_quantize.1} parent=0 // loop_body
    %s17 = ssub.s32 %s12, 1
    %s18 = ssub.s32 %s12, 2
    %s25 = sadd.s32 1, %s20
    %p26 = scmp.ge.s32.totalorder %s25, 1
    %s27 = scalar_select %p26, 0, %s25
    %s28 = sadd.s32 1, %s19
    %s29 = scalar_select %p26, %s28, %s19
    %p30 = scmp.ge.s32.totalorder %s29, 2
    %s31 = scalar_select %p30, 0, %s29
    %s32 = ssub.s32 %s19, %s31
    %s33 = ssub.s32 %s20, %s27
    %s34 = sor.u32 %s32, %s33
    %p35 = scmp.eq.s32.totalorder %s34, 0
    %s37 = sadd.s32 %s36, 1
    %s38 = scalar_select %p35, %s36, %s37
    %p41 = pneg %p35
    %p42 = scmp.eq.s32.totalorder %s12, 1
    %p43 = por %p41, %p42
    %p44 = scmp.ne.s32.totalorder %s36, %s39
    %p45 = scmp.eq.s32.totalorder %s12, 0
    %p46 = por %p44, %p45
    %p47 = scmp.ne.s32.totalorder %s36, %s39
    %p48 = scmp.eq.s32.totalorder %s17, 1
    %p49 = por %p47, %p48
    %p50 = scmp.ne.s32.totalorder %s39, %s40
    %p51 = scmp.eq.s32.totalorder %s17, 0
    %p52 = por %p50, %p51
    %p53 = scmp.ne.s32.totalorder %s39, %s40
    %p54 = scmp.eq.s32.totalorder %s18, 1
    %p55 = por %p53, %p54
    %p57 = scmp.ne.s32.totalorder %s40, %s56
    %p58 = scmp.eq.s32.totalorder %s18, 0
    %p59 = por %p57, %p58
    %s61 = sadd.s32 %s60, 1
    %p64 = scmp.eq.s32.totalorder %s12, 1
    %p65 = scmp.ne.s32.totalorder %s60, %s62
    %p66 = scmp.eq.s32.totalorder %s12, 0
    %p67 = por %p65, %p66
    %p68 = scmp.ne.s32.totalorder %s60, %s62
    %p69 = scmp.eq.s32.totalorder %s17, 1
    %p70 = por %p68, %p69
    %p71 = scmp.ne.s32.totalorder %s62, %s63
    %p72 = scmp.eq.s32.totalorder %s17, 0
    %p73 = por %p71, %p72
    %p74 = scmp.ne.s32.totalorder %s62, %s63
    %p75 = scmp.eq.s32.totalorder %s18, 1
    %p76 = por %p74, %p75
    %p78 = scmp.ne.s32.totalorder %s63, %s77
    %p79 = scmp.eq.s32.totalorder %s18, 0
    %p80 = por %p78, %p79
    %s82 = sadd.s32 %s81, 1
    %p85 = scmp.eq.s32.totalorder %s12, 1
    %p86 = scmp.ne.s32.totalorder %s81, %s83
    %p87 = scmp.eq.s32.totalorder %s12, 0
    %p88 = por %p86, %p87
    %p89 = scmp.ne.s32.totalorder %s81, %s83
    %p90 = scmp.eq.s32.totalorder %s17, 1
    %p91 = por %p89, %p90
    %p92 = scmp.ne.s32.totalorder %s83, %s84
    %p93 = scmp.eq.s32.totalorder %s17, 0
    %p94 = por %p92, %p93
    %p95 = scmp.ne.s32.totalorder %s83, %s84
    %p96 = scmp.eq.s32.totalorder %s18, 1
    %p97 = por %p95, %p96
    %p99 = scmp.ne.s32.totalorder %s84, %s98
    %p100 = scmp.eq.s32.totalorder %s18, 0
    %p101 = por %p99, %p100
    %s102 = ssub.s32 %s19, %s31
    %s103 = ssub.s32 %s20, %s27
    %s104 = sor.u32 %s102, %s103
    %p105 = scmp.eq.s32.totalorder %s104, 0
    %s107 = sadd.s32 %s106, 1
    %s108 = scalar_select %p105, %s106, %s107
    %p111 = pneg %p105
    %p112 = scmp.eq.s32.totalorder %s12, 1
    %p113 = por %p111, %p112
    %p114 = scmp.ne.s32.totalorder %s106, %s109
    %p115 = scmp.eq.s32.totalorder %s12, 0
    %p116 = por %p114, %p115
    %p117 = scmp.ne.s32.totalorder %s106, %s109
    %p118 = scmp.eq.s32.totalorder %s17, 1
    %p119 = por %p117, %p118
    %p120 = scmp.ne.s32.totalorder %s109, %s110
    %p121 = scmp.eq.s32.totalorder %s17, 0
    %p122 = por %p120, %p121
    %p123 = scmp.ne.s32.totalorder %s109, %s110
    %p124 = scmp.eq.s32.totalorder %s18, 1
    %p125 = por %p123, %p124
    %p127 = scmp.ne.s32.totalorder %s110, %s126
    %p128 = scmp.eq.s32.totalorder %s18, 0
    %p129 = por %p127, %p128
    %s130 = ssub.s32 %s19, %s31
    %s131 = ssub.s32 %s20, %s27
    %s132 = sor.u32 %s130, %s131
    %p133 = scmp.eq.s32.totalorder %s132, 0
    %s135 = sadd.s32 %s134, 1
    %s136 = scalar_select %p133, %s134, %s135
    %p139 = pneg %p133
    %p140 = scmp.eq.s32.totalorder %s12, 1
    %p141 = por %p139, %p140
    %p142 = scmp.ne.s32.totalorder %s134, %s137
    %p143 = scmp.eq.s32.totalorder %s12, 0
    %p144 = por %p142, %p143
    %p145 = scmp.ne.s32.totalorder %s134, %s137
    %p146 = scmp.eq.s32.totalorder %s17, 1
    %p147 = por %p145, %p146
    %p148 = scmp.ne.s32.totalorder %s137, %s138
    %p149 = scmp.eq.s32.totalorder %s17, 0
    %p150 = por %p148, %p149
    %p151 = scmp.ne.s32.totalorder %s137, %s138
    %p152 = scmp.eq.s32.totalorder %s18, 1
    %p153 = por %p151, %p152
    %p155 = scmp.ne.s32.totalorder %s138, %s154
    %p156 = scmp.eq.s32.totalorder %s18, 0
    %p157 = por %p155, %p156
    %s158 = ssub.s32 %s19, %s31
    %s159 = ssub.s32 %s20, %s27
    %s160 = sor.u32 %s158, %s159
    %p161 = scmp.eq.s32.totalorder %s160, 0
    %s163 = sadd.s32 %s162, 1
    %s164 = scalar_select %p161, %s162, %s163
    %p167 = pneg %p161
    %p168 = scmp.eq.s32.totalorder %s12, 1
    %p169 = por %p167, %p168
    %p170 = scmp.ne.s32.totalorder %s162, %s165
    %p171 = scmp.eq.s32.totalorder %s12, 0
    %p172 = por %p170, %p171
    %p173 = scmp.ne.s32.totalorder %s162, %s165
    %p174 = scmp.eq.s32.totalorder %s17, 1
    %p175 = por %p173, %p174
    %p176 = scmp.ne.s32.totalorder %s165, %s166
    %p177 = scmp.eq.s32.totalorder %s17, 0
    %p178 = por %p176, %p177
    %p179 = scmp.ne.s32.totalorder %s165, %s166
    %p180 = scmp.eq.s32.totalorder %s18, 1
    %p181 = por %p179, %p180
    %p183 = scmp.ne.s32.totalorder %s166, %s182
    %p184 = scmp.eq.s32.totalorder %s18, 0
    %p185 = por %p183, %p184
    %p186 = scmp.le.s32.totalorder 1, %s12
    %p187 = scmp.lt.s32.totalorder %s12, 3
    %p188 = pnand %p186, %p187
    %p189 = pneg %p188
    // Predicated region
    $region9: #{mask_vector_quantize.1} parent=5 // pred_check
      _
    $region10: #{mask_vector_quantize.1} parent=5 // pred_check_branch
      %191 = sbr.rel (%p188) target = $region12
    $region11: #{mask_vector_quantize.1} parent=5 // pred_region
      %s192 = ssub.s32 %s12, 1
      // Predicated region
      $region13: #{mask_vector_quantize.1} parent=11 // pred_check
        %p193 = pneg %p73
      $region14: #{mask_vector_quantize.1} parent=11 // pred_check_branch
        %195 = sbr.rel (%p193) target = $region16
      $region15: #{mask_vector_quantize.1} parent=11 // pred_region
        _
      $region16: #{mask_vector_quantize.1} parent=11 // pred_fallthru
        _
      // Predicated region
      $region17: #{mask_vector_quantize.1} parent=11 // pred_check
        %p196 = pneg %p94
      $region18: #{mask_vector_quantize.1} parent=11 // pred_check_branch
        %198 = sbr.rel (%p196) target = $region20
      $region19: #{mask_vector_quantize.1} parent=11 // pred_region
        _
      $region20: #{mask_vector_quantize.1} parent=11 // pred_fallthru
        _
    $region12: #{mask_vector_quantize.1} parent=5 // pred_fallthru
      _
    %p199 = scmp.lt.s32.totalorder %s12, 2
    // Predicated region
    $region21: #{mask_vector_quantize.1} parent=5 // pred_check
      %p200 = pneg %p199
    $region22: #{mask_vector_quantize.1} parent=5 // pred_check_branch
      %202 = sbr.rel (%p200) target = $region24
    $region23: #{mask_vector_quantize.1} parent=5 // pred_region
      // Predicated region
      $region25: #{mask_vector_quantize.1} parent=23 // pred_check
        %p203 = pneg %p46
      $region26: #{mask_vector_quantize.1} parent=23 // pred_check_branch
        %205 = sbr.rel (%p203) target = $region28
      $region27: #{mask_vector_quantize.1} parent=23 // pred_region
        %s206 = smul.u32 2, %s20
        %p207 = scmp.lt.s32.totalorder %s19, 1
        %s208 = scalar_select %p207, %s19, 1
        %p209 = scmp.lt.s32.totalorder %s206, 1
        %s210 = scalar_select %p209, %s206, 1
        %s211 = smul.addr %s208, 8
        %s212 = sadd.s32 %s210, %s211
        %s213 = smul.addr %s212, 8
        %s214 = scalar_lea.vmem %s0, %s213
        %s215 = smul.u32 2, %s20
      $region28: #{mask_vector_quantize.1} parent=23 // pred_fallthru
        _
    $region24: #{mask_vector_quantize.1} parent=5 // pred_fallthru
      _
    %p216 = scmp.le.s32.totalorder 1, %s12
    %p217 = scmp.lt.s32.totalorder %s12, 3
    %p218 = pnand %p216, %p217
    %p219 = pneg %p218
    // Predicated region
    $region29: #{mask_vector_quantize.1} parent=5 // pred_check
      _
    $region30: #{mask_vector_quantize.1} parent=5 // pred_check_branch
      %221 = sbr.rel (%p218) target = $region32
    $region31: #{mask_vector_quantize.1} parent=5 // pred_region
      %s222 = ssub.s32 %s12, 1
      %s223 = smul.u32 2, %s22
      %p224 = scmp.lt.s32.totalorder %s21, 1
      %s225 = scalar_select %p224, %s21, 1
      %p226 = scmp.lt.s32.totalorder %s223, 1
      %s227 = scalar_select %p226, %s223, 1
      %s228 = smul.addr %s225, 8
      %s229 = sadd.s32 %s227, %s228
      %s230 = smul.addr %s229, 8
      %s231 = scalar_lea.vmem %s0, %s230
      %p232 = pneg %p52
      %p233 = pneg %p49
      %p234 = pneg %p73
      %p235 = pneg %p70
      %p236 = pneg %p94
      %p237 = pneg %p91
      %p238 = pneg %p122
      %p239 = pneg %p119
      %s240 = smul.u32 2, %s22
      %p241 = scmp.lt.s32.totalorder %s21, 1
      %s242 = scalar_select %p241, %s21, 1
      %p243 = scmp.lt.s32.totalorder %s240, 1
      %s244 = scalar_select %p243, %s240, 1
      %s245 = smul.addr %s242, 8
      %s246 = sadd.s32 %s244, %s245
      %s247 = smul.addr %s246, 8
      %s248 = scalar_lea.vmem %s3, %s247
      %p249 = pneg %p150
      %p250 = pneg %p147
      %s251 = smul.u32 2, %s22
      %p252 = scmp.lt.s32.totalorder %s21, 1
      %s253 = scalar_select %p252, %s21, 1
      %p254 = scmp.lt.s32.totalorder %s251, 1
      %s255 = scalar_select %p254, %s251, 1
      %s256 = smul.addr %s253, 2
      %s257 = sadd.s32 %s255, %s256
      %s258 = scalar_lea.vmem %s4, %s257
      %p259 = pneg %p178
      %p260 = pneg %p175
      %s261 = smul.u32 2, %s22
      %p262 = scmp.lt.s32.totalorder %s21, 1
      %s263 = scalar_select %p262, %s21, 1
      %p264 = scmp.lt.s32.totalorder %s261, 1
      %s265 = scalar_select %p264, %s261, 1
      %s266 = smul.addr %s263, 2
      %s267 = sadd.s32 %s265, %s266
      %s268 = scalar_lea.vmem %s5, %s267
      %s269 = smul.u32 2, %s22
      %p270 = scmp.lt.s32.totalorder %s21, 1
      %s271 = scalar_select %p270, %s21, 1
      %p272 = scmp.lt.s32.totalorder %s269, 1
      %s273 = scalar_select %p272, %s269, 1
      %s274 = smul.addr %s271, 8
      %s275 = sadd.s32 %s273, %s274
      %s276 = smul.addr %s275, 8
      %s277 = scalar_lea.vmem %s0, %s276
      %s278 = smul.u32 2, %s22
      %s279 = smul.u32 2, %s22
      %p280 = scmp.lt.s32.totalorder %s21, 1
      %s281 = scalar_select %p280, %s21, 1
      %p282 = scmp.lt.s32.totalorder %s279, 1
      %s283 = scalar_select %p282, %s279, 1
      %s284 = smul.addr %s281, 8
      %s285 = sadd.s32 %s283, %s284
      %s286 = smul.addr %s285, 8
      %s287 = scalar_lea.vmem %s3, %s286
      %s288 = smul.u32 2, %s22
      %s289 = smul.u32 2, %s22
      %p290 = scmp.lt.s32.totalorder %s21, 1
      %s291 = scalar_select %p290, %s21, 1
      %p292 = scmp.lt.s32.totalorder %s289, 1
      %s293 = scalar_select %p292, %s289, 1
      %s294 = smul.addr %s291, 2
      %s295 = sadd.s32 %s293, %s294
      %s296 = scalar_lea.vmem %s4, %s295
      %s297 = smul.u32 2, %s22
      %s298 = smul.u32 2, %s22
      %p299 = scmp.lt.s32.totalorder %s21, 1
      %s300 = scalar_select %p299, %s21, 1
      %p301 = scmp.lt.s32.totalorder %s298, 1
      %s302 = scalar_select %p301, %s298, 1
      %s303 = smul.addr %s300, 2
      %s304 = sadd.s32 %s302, %s303
      %s305 = scalar_lea.vmem %s5, %s304
      %s306 = smul.u32 2, %s22
      %v309 = vld [vmem:[%s277] sm:$0xff]
      %v310 = vld [vmem:[%s277 + $0x8] sm:$0xff]
      %v311 = vld [vmem:[%s277 + $0x10] sm:$0xff]
      %v312 = vld [vmem:[%s277 + $0x18] sm:$0xff]
      %v313 = vld [vmem:[%s277 + $0x20] sm:$0xff]
      %v314 = vld [vmem:[%s277 + $0x28] sm:$0xff]
      %v315 = vld [vmem:[%s277 + $0x30] sm:$0xff]
      %v316 = vld [vmem:[%s277 + $0x38] sm:$0xff]
      %v317 = vpack.c.bf16 %v310, %v309
      %v318 = vpack.c.bf16 %v312, %v311
      %v319 = vpack.c.bf16 %v314, %v313
      %v320 = vpack.c.bf16 %v316, %v315
      %321 = vst [vmem:[#allocation2] sm:$0xff] %v317
      %322 = vst [vmem:[#allocation2 + $0x8] sm:$0xff] %v318
      %323 = vst [vmem:[#allocation2 + $0x10] sm:$0xff] %v319
      %324 = vst [vmem:[#allocation2 + $0x18] sm:$0xff] %v320
      %325 = vst [vmem:[#allocation2 + $0x20] sm:$0xff] 1065369472
      %326 = vst [vmem:[#allocation2 + $0x28] sm:$0xff] 1065369472
      %v327 = vld [vmem:[%s1] sm:$0xf]
      %v328 = vld [vmem:[%s1 + $0x4] sm:$0xf]
      %v329 = vld [vmem:[%s1 + $0x8] sm:$0xf]
      %v330 = vld [vmem:[%s1 + $0xc] sm:$0xf]
      %v331 = vld [vmem:[%s1 + $0x10] sm:$0xf]
      %v332 = vld [vmem:[%s1 + $0x14] sm:$0xf]
      %v333 = vld [vmem:[%s1 + $0x18] sm:$0xf]
      %v334 = vld [vmem:[%s1 + $0x1c] sm:$0xf]
      %v335 = vld [vmem:[%s1 + $0x20] sm:$0xf]
      %v336 = vld [vmem:[%s1 + $0x24] sm:$0xf]
      %v337 = vld [vmem:[%s1 + $0x28] sm:$0xf]
      %v338 = vld [vmem:[%s1 + $0x2c] sm:$0xf]
      %v339 = vld [vmem:[%s1 + $0x30] sm:$0xf]
      %v340 = vld [vmem:[%s1 + $0x34] sm:$0xf]
      %v341 = vld [vmem:[%s1 + $0x38] sm:$0xf]
      %v342 = vld [vmem:[%s1 + $0x3c] sm:$0xf]
      %v343 = vld [vmem:[%s1 + $0x40] sm:$0xf]
      %v344 = vld [vmem:[%s1 + $0x44] sm:$0xf]
      %v345 = vld [vmem:[%s1 + $0x48] sm:$0xf]
      %v346 = vld [vmem:[%s1 + $0x4c] sm:$0xf]
      %v347 = vld [vmem:[%s1 + $0x50] sm:$0xf]
      %v348 = vld [vmem:[%s1 + $0x54] sm:$0xf]
      %v349 = vld [vmem:[%s1 + $0x58] sm:$0xf]
      %v350 = vld [vmem:[%s1 + $0x5c] sm:$0xf]
      %v351 = vld [vmem:[%s1 + $0x60] sm:$0xf]
      %v352 = vld [vmem:[%s1 + $0x64] sm:$0xf]
      %v353 = vld [vmem:[%s1 + $0x68] sm:$0xf]
      %v354 = vld [vmem:[%s1 + $0x6c] sm:$0xf]
      %v355 = vld [vmem:[%s1 + $0x70] sm:$0xf]
      %v356 = vld [vmem:[%s1 + $0x74] sm:$0xf]
      %v357 = vld [vmem:[%s1 + $0x78] sm:$0xf]
      %v358 = vld [vmem:[%s1 + $0x7c] sm:$0xf]
      %v359 = vld [vmem:[#allocation2] sm:$0xff]
      %v360 = vld [vmem:[#allocation2 + $0x8] sm:$0xff]
      %v361 = vld [vmem:[#allocation2 + $0x10] sm:$0xff]
      %v362 = vld [vmem:[#allocation2 + $0x18] sm:$0xff]
      %v363 = vld [vmem:[#allocation2 + $0x20] sm:$0xff]
      %v364 = vld [vmem:[#allocation2 + $0x28] sm:$0xff]
      %v397 = vunpack.c.l.b16 %v327
      %v398 = vunpack.c.l.b16 %v328
      %v399 = vunpack.c.l.b16 %v329
      %v400 = vunpack.c.l.b16 %v330
      %v401 = vunpack.c.l.b16 %v331
      %v402 = vunpack.c.l.b16 %v332
      %v403 = vunpack.c.l.b16 %v333
      %v404 = vunpack.c.l.b16 %v334
      %v405 = vunpack.c.l.b16 %v335
      %v406 = vunpack.c.l.b16 %v336
      %v407 = vunpack.c.l.b16 %v337
      %v408 = vunpack.c.l.b16 %v338
      %v409 = vunpack.c.l.b16 %v339
      %v410 = vunpack.c.l.b16 %v340
      %v411 = vunpack.c.l.b16 %v341
      %v412 = vunpack.c.l.b16 %v342
      %v413 = vunpack.c.l.b16 %v343
      %v414 = vunpack.c.l.b16 %v344
      %v415 = vunpack.c.l.b16 %v345
      %v416 = vunpack.c.l.b16 %v346
      %v417 = vunpack.c.l.b16 %v347
      %v418 = vunpack.c.l.b16 %v348
      %v419 = vunpack.c.l.b16 %v349
      %v420 = vunpack.c.l.b16 %v350
      %v421 = vunpack.c.l.b16 %v351
      %v422 = vunpack.c.l.b16 %v352
      %v423 = vunpack.c.l.b16 %v353
      %v424 = vunpack.c.l.b16 %v354
      %v425 = vunpack.c.l.b16 %v355
      %v426 = vunpack.c.l.b16 %v356
      %v427 = vunpack.c.l.b16 %v357
      %v428 = vunpack.c.l.b16 %v358
      %v429 = vpack.c.b16 %v398, %v397
      %v430 = vpack.c.b16 %v400, %v399
      %v431 = vpack.c.b16 %v402, %v401
      %v432 = vpack.c.b16 %v404, %v403
      %v433 = vpack.c.b16 %v406, %v405
      %v434 = vpack.c.b16 %v408, %v407
      %v435 = vpack.c.b16 %v410, %v409
      %v436 = vpack.c.b16 %v412, %v411
      %v437 = vpack.c.b16 %v414, %v413
      %v438 = vpack.c.b16 %v416, %v415
      %v439 = vpack.c.b16 %v418, %v417
      %v440 = vpack.c.b16 %v420, %v419
      %v441 = vpack.c.b16 %v422, %v421
      %v442 = vpack.c.b16 %v424, %v423
      %v443 = vpack.c.b16 %v426, %v425
      %v444 = vpack.c.b16 %v428, %v427
      %v451 = vunpack.c.l.b16 %v359
      %v452 = vunpack.c.h.b16 %v359
      %v453 = vunpack.c.l.b16 %v360
      %v454 = vunpack.c.h.b16 %v360
      %v455 = vunpack.c.l.b16 %v361
      %v456 = vunpack.c.h.b16 %v361
      %v457 = vunpack.c.l.b16 %v362
      %v458 = vunpack.c.h.b16 %v362
      %v459 = vunpack.c.l.b16 %v363
      %v460 = vunpack.c.h.b16 %v363
      %v461 = vunpack.c.l.b16 %v364
      %v462 = vunpack.c.h.b16 %v364
      %v463 = vpack.c.b16 %v453, %v451
      %v464 = vpack.c.b16 %v454, %v452
      %v465 = vpack.c.b16 %v457, %v455
      %v466 = vpack.c.b16 %v458, %v456
      %v467 = vpack.c.b16 %v461, %v459
      %v468 = vpack.c.b16 %v462, %v460
      %vm475 = vcmask 392192
      %v477 = vsel %vm475, %v429, 0
      %v480 = vsel %vm475, %v430, 0
      %v483 = vsel %vm475, %v431, 0
      %v486 = vsel %vm475, %v432, 0
      %v489 = vsel %vm475, %v433, 0
      %v492 = vsel %vm475, %v434, 0
      %v495 = vsel %vm475, %v435, 0
      %v498 = vsel %vm475, %v436, 0
      %v501 = vsel %vm475, %v437, 0
      %v504 = vsel %vm475, %v438, 0
      %v507 = vsel %vm475, %v439, 0
      %v510 = vsel %vm475, %v440, 0
      %v513 = vsel %vm475, %v441, 0
      %v516 = vsel %vm475, %v442, 0
      %v519 = vsel %vm475, %v443, 0
      %v522 = vsel %vm475, %v444, 0
      %524 = vmatpush.bf16.msra.mxu0 0
      %525 = vmatpush.bf16.msra.mxu0 0
      %526 = vmatpush.bf16.msra.mxu0 0
      %527 = vmatpush.bf16.msra.mxu0 0
      %528 = vmatpush.bf16.msra.mxu0 0
      %529 = vmatpush.bf16.msra.mxu0 %v467
      %530 = vmatpush.bf16.msra.mxu0 %v465
      %531 = vmatpush.bf16.msra.mxu0 %v463
      %532 = vmatmul.bf16.gmra.mxu0 %v477
      %v533 = vpop.f32.mrf.mxu0
      %v534 = vadd.f32 0.0, %v533
      %v535 = vpop.f32.mrf.mxu0
      %v536 = vadd.f32 0.0, %v535
      %537 = vmatmul.bf16.gmra.mxu0 %v480
      %v538 = vpop.f32.mrf.mxu0
      %v539 = vadd.f32 0.0, %v538
      %v540 = vpop.f32.mrf.mxu0
      %v541 = vadd.f32 0.0, %v540
      %542 = vmatmul.bf16.gmra.mxu0 %v483
      %v543 = vpop.f32.mrf.mxu0
      %v544 = vadd.f32 0.0, %v543
      %v545 = vpop.f32.mrf.mxu0
      %v546 = vadd.f32 0.0, %v545
      %547 = vmatmul.bf16.gmra.mxu0 %v486
      %v548 = vpop.f32.mrf.mxu0
      %v549 = vadd.f32 0.0, %v548
      %v550 = vpop.f32.mrf.mxu0
      %v551 = vadd.f32 0.0, %v550
      %552 = vmatmul.bf16.gmra.mxu0 %v489
      %v553 = vpop.f32.mrf.mxu0
      %v554 = vadd.f32 0.0, %v553
      %v555 = vpop.f32.mrf.mxu0
      %v556 = vadd.f32 0.0, %v555
      %557 = vmatmul.bf16.gmra.mxu0 %v492
      %v558 = vpop.f32.mrf.mxu0
      %v559 = vadd.f32 0.0, %v558
      %v560 = vpop.f32.mrf.mxu0
      %v561 = vadd.f32 0.0, %v560
      %562 = vmatmul.bf16.gmra.mxu0 %v495
      %v563 = vpop.f32.mrf.mxu0
      %v564 = vadd.f32 0.0, %v563
      %v565 = vpop.f32.mrf.mxu0
      %v566 = vadd.f32 0.0, %v565
      %567 = vmatmul.bf16.gmra.mxu0 %v498
      %v568 = vpop.f32.mrf.mxu0
      %v569 = vadd.f32 0.0, %v568
      %v570 = vpop.f32.mrf.mxu0
      %v571 = vadd.f32 0.0, %v570
      %572 = vmatmul.bf16.gmra.mxu0 %v501
      %v573 = vpop.f32.mrf.mxu0
      %v574 = vadd.f32 0.0, %v573
      %v575 = vpop.f32.mrf.mxu0
      %v576 = vadd.f32 0.0, %v575
      %577 = vmatmul.bf16.gmra.mxu0 %v504
      %v578 = vpop.f32.mrf.mxu0
      %v579 = vadd.f32 0.0, %v578
      %v580 = vpop.f32.mrf.mxu0
      %v581 = vadd.f32 0.0, %v580
      %582 = vmatmul.bf16.gmra.mxu0 %v507
      %v583 = vpop.f32.mrf.mxu0
      %v584 = vadd.f32 0.0, %v583
      %v585 = vpop.f32.mrf.mxu0
      %v586 = vadd.f32 0.0, %v585
      %587 = vmatmul.bf16.gmra.mxu0 %v510
      %v588 = vpop.f32.mrf.mxu0
      %v589 = vadd.f32 0.0, %v588
      %v590 = vpop.f32.mrf.mxu0
      %v591 = vadd.f32 0.0, %v590
      %592 = vmatmul.bf16.gmra.mxu0 %v513
      %v593 = vpop.f32.mrf.mxu0
      %v594 = vadd.f32 0.0, %v593
      %v595 = vpop.f32.mrf.mxu0
      %v596 = vadd.f32 0.0, %v595
      %597 = vmatmul.bf16.gmra.mxu0 %v516
      %v598 = vpop.f32.mrf.mxu0
      %v599 = vadd.f32 0.0, %v598
      %v600 = vpop.f32.mrf.mxu0
      %v601 = vadd.f32 0.0, %v600
      %602 = vmatmul.bf16.gmra.mxu0 %v519
      %v603 = vpop.f32.mrf.mxu0
      %v604 = vadd.f32 0.0, %v603
      %v605 = vpop.f32.mrf.mxu0
      %v606 = vadd.f32 0.0, %v605
      %607 = vmatmul.bf16.gmra.mxu0 %v522
      %v608 = vpop.f32.mrf.mxu0
      %v609 = vadd.f32 0.0, %v608
      %v610 = vpop.f32.mrf.mxu0
      %v611 = vadd.f32 0.0, %v610
      %612 = vdwg.mxu0
      %613 = vmatpush.bf16.msra.mxu0 0
      %614 = vmatpush.bf16.msra.mxu0 0
      %615 = vmatpush.bf16.msra.mxu0 0
      %616 = vmatpush.bf16.msra.mxu0 0
      %617 = vmatpush.bf16.msra.mxu0 0
      %618 = vmatpush.bf16.msra.mxu0 %v468
      %619 = vmatpush.bf16.msra.mxu0 %v466
      %620 = vmatpush.bf16.msra.mxu0 %v464
      %621 = vmatmul.bf16.gmra.mxu0 %v477
      %v622 = vpop.f32.mrf.mxu0
      %v623 = vadd.f32 0.0, %v622
      %v624 = vpop.f32.mrf.mxu0
      %v625 = vadd.f32 0.0, %v624
      %626 = vmatmul.bf16.gmra.mxu0 %v480
      %v627 = vpop.f32.mrf.mxu0
      %v628 = vadd.f32 0.0, %v627
      %v629 = vpop.f32.mrf.mxu0
      %v630 = vadd.f32 0.0, %v629
      %631 = vmatmul.bf16.gmra.mxu0 %v483
      %v632 = vpop.f32.mrf.mxu0
      %v633 = vadd.f32 0.0, %v632
      %v634 = vpop.f32.mrf.mxu0
      %v635 = vadd.f32 0.0, %v634
      %636 = vmatmul.bf16.gmra.mxu0 %v486
      %v637 = vpop.f32.mrf.mxu0
      %v638 = vadd.f32 0.0, %v637
      %v639 = vpop.f32.mrf.mxu0
      %v640 = vadd.f32 0.0, %v639
      %641 = vmatmul.bf16.gmra.mxu0 %v489
      %v642 = vpop.f32.mrf.mxu0
      %v643 = vadd.f32 0.0, %v642
      %v644 = vpop.f32.mrf.mxu0
      %v645 = vadd.f32 0.0, %v644
      %646 = vmatmul.bf16.gmra.mxu0 %v492
      %v647 = vpop.f32.mrf.mxu0
      %v648 = vadd.f32 0.0, %v647
      %v649 = vpop.f32.mrf.mxu0
      %v650 = vadd.f32 0.0, %v649
      %651 = vmatmul.bf16.gmra.mxu0 %v495
      %v652 = vpop.f32.mrf.mxu0
      %v653 = vadd.f32 0.0, %v652
      %v654 = vpop.f32.mrf.mxu0
      %v655 = vadd.f32 0.0, %v654
      %656 = vmatmul.bf16.gmra.mxu0 %v498
      %v657 = vpop.f32.mrf.mxu0
      %v658 = vadd.f32 0.0, %v657
      %v659 = vpop.f32.mrf.mxu0
      %v660 = vadd.f32 0.0, %v659
      %661 = vmatmul.bf16.gmra.mxu0 %v501
      %v662 = vpop.f32.mrf.mxu0
      %v663 = vadd.f32 0.0, %v662
      %v664 = vpop.f32.mrf.mxu0
      %v665 = vadd.f32 0.0, %v664
      %666 = vmatmul.bf16.gmra.mxu0 %v504
      %v667 = vpop.f32.mrf.mxu0
      %v668 = vadd.f32 0.0, %v667
      %v669 = vpop.f32.mrf.mxu0
      %v670 = vadd.f32 0.0, %v669
      %671 = vmatmul.bf16.gmra.mxu0 %v507
      %v672 = vpop.f32.mrf.mxu0
      %v673 = vadd.f32 0.0, %v672
      %v674 = vpop.f32.mrf.mxu0
      %v675 = vadd.f32 0.0, %v674
      %676 = vmatmul.bf16.gmra.mxu0 %v510
      %v677 = vpop.f32.mrf.mxu0
      %v678 = vadd.f32 0.0, %v677
      %v679 = vpop.f32.mrf.mxu0
      %v680 = vadd.f32 0.0, %v679
      %681 = vmatmul.bf16.gmra.mxu0 %v513
      %v682 = vpop.f32.mrf.mxu0
      %v683 = vadd.f32 0.0, %v682
      %v684 = vpop.f32.mrf.mxu0
      %v685 = vadd.f32 0.0, %v684
      %686 = vmatmul.bf16.gmra.mxu0 %v516
      %v687 = vpop.f32.mrf.mxu0
      %v688 = vadd.f32 0.0, %v687
      %v689 = vpop.f32.mrf.mxu0
      %v690 = vadd.f32 0.0, %v689
      %691 = vmatmul.bf16.gmra.mxu0 %v519
      %v692 = vpop.f32.mrf.mxu0
      %v693 = vadd.f32 0.0, %v692
      %v694 = vpop.f32.mrf.mxu0
      %v695 = vadd.f32 0.0, %v694
      %696 = vmatmul.bf16.gmra.mxu0 %v522
      %v697 = vpop.f32.mrf.mxu0
      %v698 = vadd.f32 0.0, %v697
      %v699 = vpop.f32.mrf.mxu0
      %v700 = vadd.f32 0.0, %v699
      %701 = vdwg.mxu0
      %v702 = vlaneseq
      %v703 = vshrl.u32 %v702, 7
      %v704 = vadd.s32 %v703, 8
      %v705 = vadd.s32 %v703, 16
      %v706 = vadd.s32 %v703, 24
      %v707 = vadd.s32 %v703, 32
      %v708 = vadd.s32 %v703, 40
      %v709 = vadd.s32 %v703, 48
      %v710 = vadd.s32 %v703, 56
      %v711 = vadd.s32 %v703, 64
      %v712 = vadd.s32 %v703, 72
      %v713 = vadd.s32 %v703, 80
      %v714 = vadd.s32 %v703, 88
      %v715 = vadd.s32 %v703, 96
      %v716 = vadd.s32 %v703, 104
      %v717 = vadd.s32 %v703, 112
      %v718 = vadd.s32 %v703, 120
      %v719 = vadd.s32 %v703, 128
      %v720 = vadd.s32 %v703, 136
      %v721 = vadd.s32 %v703, 144
      %v722 = vadd.s32 %v703, 152
      %v723 = vadd.s32 %v703, 160
      %v724 = vadd.s32 %v703, 168
      %v725 = vadd.s32 %v703, 176
      %v726 = vadd.s32 %v703, 184
      %v727 = vadd.s32 %v703, 192
      %v728 = vadd.s32 %v703, 200
      %v729 = vadd.s32 %v703, 208
      %v730 = vadd.s32 %v703, 216
      %v731 = vadd.s32 %v703, 224
      %v732 = vadd.s32 %v703, 232
      %v733 = vadd.s32 %v703, 240
      %v734 = vadd.s32 %v703, 248
      %v735 = vmin.f32 %v534, %v539
      %v736 = vmin.f32 %v536, %v541
      %v737 = vmin.f32 %v735, %v544
      %v738 = vmin.f32 %v736, %v546
      %v739 = vmin.f32 %v737, %v549
      %v740 = vmin.f32 %v738, %v551
      %v741 = vmin.f32 %v739, %v554
      %v742 = vmin.f32 %v740, %v556
      %v743 = vmin.f32 %v741, %v559
      %v744 = vmin.f32 %v742, %v561
      %v745 = vmin.f32 %v743, %v564
      %v746 = vmin.f32 %v744, %v566
      %v747 = vmin.f32 %v745, %v569
      %v748 = vmin.f32 %v746, %v571
      %v749 = vmin.f32 %v747, %v574
      %v750 = vmin.f32 %v748, %v576
      %v751 = vmin.f32 %v749, %v579
      %v752 = vmin.f32 %v750, %v581
      %v753 = vmin.f32 %v751, %v584
      %v754 = vmin.f32 %v752, %v586
      %v755 = vmin.f32 %v753, %v589
      %v756 = vmin.f32 %v754, %v591
      %v757 = vmin.f32 %v755, %v594
      %v758 = vmin.f32 %v756, %v596
      %v759 = vmin.f32 %v757, %v599
      %v760 = vmin.f32 %v758, %v601
      %v761 = vmin.f32 %v759, %v604
      %v762 = vmin.f32 %v760, %v606
      %v763 = vmin.f32 %v761, %v609
      %v764 = vmin.f32 %v762, %v611
      %v765 = vmin.f32 %v763, %v764
      %v766 = vrot.slane %v765, 4
      %v767 = vmin.f32 %v765, %v766
      %v768 = vrot.slane %v767, 2
      %v769 = vmin.f32 %v767, %v768
      %v770 = vrot.slane %v769, 1
      %v771 = vmin.f32 %v769, %v770
      %v772 = vmin.f32 %v623, %v628
      %v773 = vmin.f32 %v625, %v630
      %v774 = vmin.f32 %v772, %v633
      %v775 = vmin.f32 %v773, %v635
      %v776 = vmin.f32 %v774, %v638
      %v777 = vmin.f32 %v775, %v640
      %v778 = vmin.f32 %v776, %v643
      %v779 = vmin.f32 %v777, %v645
      %v780 = vmin.f32 %v778, %v648
      %v781 = vmin.f32 %v779, %v650
      %v782 = vmin.f32 %v780, %v653
      %v783 = vmin.f32 %v781, %v655
      %v784 = vmin.f32 %v782, %v658
      %v785 = vmin.f32 %v783, %v660
      %v786 = vmin.f32 %v784, %v663
      %v787 = vmin.f32 %v785, %v665
      %v788 = vmin.f32 %v786, %v668
      %v789 = vmin.f32 %v787, %v670
      %v790 = vmin.f32 %v788, %v673
      %v791 = vmin.f32 %v789, %v675
      %v792 = vmin.f32 %v790, %v678
      %v793 = vmin.f32 %v791, %v680
      %v794 = vmin.f32 %v792, %v683
      %v795 = vmin.f32 %v793, %v685
      %v796 = vmin.f32 %v794, %v688
      %v797 = vmin.f32 %v795, %v690
      %v798 = vmin.f32 %v796, %v693
      %v799 = vmin.f32 %v797, %v695
      %v800 = vmin.f32 %v798, %v698
      %v801 = vmin.f32 %v799, %v700
      %v802 = vmin.f32 %v800, %v801
      %v803 = vrot.slane %v802, 4
      %v804 = vmin.f32 %v802, %v803
      %v805 = vrot.slane %v804, 2
      %v806 = vmin.f32 %v804, %v805
      %v807 = vrot.slane %v806, 1
      %v808 = vmin.f32 %v806, %v807
      %vm809 = vcmp.le.f32.partialorder %v534, %v771
      %vm810 = vcmp.le.f32.partialorder %v623, %v808
      %vm811 = vcmp.le.f32.partialorder %v536, %v771
      %vm812 = vcmp.le.f32.partialorder %v625, %v808
      %vm813 = vcmp.le.f32.partialorder %v539, %v771
      %vm814 = vcmp.le.f32.partialorder %v628, %v808
      %vm815 = vcmp.le.f32.partialorder %v541, %v771
      %vm816 = vcmp.le.f32.partialorder %v630, %v808
      %vm817 = vcmp.le.f32.partialorder %v544, %v771
      %vm818 = vcmp.le.f32.partialorder %v633, %v808
      %vm819 = vcmp.le.f32.partialorder %v546, %v771
      %vm820 = vcmp.le.f32.partialorder %v635, %v808
      %vm821 = vcmp.le.f32.partialorder %v549, %v771
      %vm822 = vcmp.le.f32.partialorder %v638, %v808
      %vm823 = vcmp.le.f32.partialorder %v551, %v771
      %vm824 = vcmp.le.f32.partialorder %v640, %v808
      %vm825 = vcmp.le.f32.partialorder %v554, %v771
      %vm826 = vcmp.le.f32.partialorder %v643, %v808
      %vm827 = vcmp.le.f32.partialorder %v556, %v771
      %vm828 = vcmp.le.f32.partialorder %v645, %v808
      %vm829 = vcmp.le.f32.partialorder %v559, %v771
      %vm830 = vcmp.le.f32.partialorder %v648, %v808
      %vm831 = vcmp.le.f32.partialorder %v561, %v771
      %vm832 = vcmp.le.f32.partialorder %v650, %v808
      %vm833 = vcmp.le.f32.partialorder %v564, %v771
      %vm834 = vcmp.le.f32.partialorder %v653, %v808
      %vm835 = vcmp.le.f32.partialorder %v566, %v771
      %vm836 = vcmp.le.f32.partialorder %v655, %v808
      %vm837 = vcmp.le.f32.partialorder %v569, %v771
      %vm838 = vcmp.le.f32.partialorder %v658, %v808
      %vm839 = vcmp.le.f32.partialorder %v571, %v771
      %vm840 = vcmp.le.f32.partialorder %v660, %v808
      %vm841 = vcmp.le.f32.partialorder %v574, %v771
      %vm842 = vcmp.le.f32.partialorder %v663, %v808
      %vm843 = vcmp.le.f32.partialorder %v576, %v771
      %vm844 = vcmp.le.f32.partialorder %v665, %v808
      %vm845 = vcmp.le.f32.partialorder %v579, %v771
      %vm846 = vcmp.le.f32.partialorder %v668, %v808
      %vm847 = vcmp.le.f32.partialorder %v581, %v771
      %vm848 = vcmp.le.f32.partialorder %v670, %v808
      %vm849 = vcmp.le.f32.partialorder %v584, %v771
      %vm850 = vcmp.le.f32.partialorder %v673, %v808
      %vm851 = vcmp.le.f32.partialorder %v586, %v771
      %vm852 = vcmp.le.f32.partialorder %v675, %v808
      %vm853 = vcmp.le.f32.partialorder %v589, %v771
      %vm854 = vcmp.le.f32.partialorder %v678, %v808
      %vm855 = vcmp.le.f32.partialorder %v591, %v771
      %vm856 = vcmp.le.f32.partialorder %v680, %v808
      %vm857 = vcmp.le.f32.partialorder %v594, %v771
      %vm858 = vcmp.le.f32.partialorder %v683, %v808
      %vm859 = vcmp.le.f32.partialorder %v596, %v771
      %vm860 = vcmp.le.f32.partialorder %v685, %v808
      %vm861 = vcmp.le.f32.partialorder %v599, %v771
      %vm862 = vcmp.le.f32.partialorder %v688, %v808
      %vm863 = vcmp.le.f32.partialorder %v601, %v771
      %vm864 = vcmp.le.f32.partialorder %v690, %v808
      %vm865 = vcmp.le.f32.partialorder %v604, %v771
      %vm866 = vcmp.le.f32.partialorder %v693, %v808
      %vm867 = vcmp.le.f32.partialorder %v606, %v771
      %vm868 = vcmp.le.f32.partialorder %v695, %v808
      %vm869 = vcmp.le.f32.partialorder %v609, %v771
      %vm870 = vcmp.le.f32.partialorder %v698, %v808
      %vm871 = vcmp.le.f32.partialorder %v611, %v771
      %vm872 = vcmp.le.f32.partialorder %v700, %v808
      %v873 = vsel %vm809, %v703, 256
      %v874 = vsel %vm810, %v703, 256
      %v875 = vsel %vm811, %v704, 256
      %v876 = vsel %vm812, %v704, 256
      %v877 = vsel %vm813, %v705, 256
      %v878 = vsel %vm814, %v705, 256
      %v879 = vsel %vm815, %v706, 256
      %v880 = vsel %vm816, %v706, 256
      %v881 = vsel %vm817, %v707, 256
      %v882 = vsel %vm818, %v707, 256
      %v883 = vsel %vm819, %v708, 256
      %v884 = vsel %vm820, %v708, 256
      %v885 = vsel %vm821, %v709, 256
      %v886 = vsel %vm822, %v709, 256
      %v887 = vsel %vm823, %v710, 256
      %v888 = vsel %vm824, %v710, 256
      %v889 = vsel %vm825, %v711, 256
      %v890 = vsel %vm826, %v711, 256
      %v891 = vsel %vm827, %v712, 256
      %v892 = vsel %vm828, %v712, 256
      %v893 = vsel %vm829, %v713, 256
      %v894 = vsel %vm830, %v713, 256
      %v895 = vsel %vm831, %v714, 256
      %v896 = vsel %vm832, %v714, 256
      %v897 = vsel %vm833, %v715, 256
      %v898 = vsel %vm834, %v715, 256
      %v899 = vsel %vm835, %v716, 256
      %v900 = vsel %vm836, %v716, 256
      %v901 = vsel %vm837, %v717, 256
      %v902 = vsel %vm838, %v717, 256
      %v903 = vsel %vm839, %v718, 256
      %v904 = vsel %vm840, %v718, 256
      %v905 = vsel %vm841, %v719, 256
      %v906 = vsel %vm842, %v719, 256
      %v907 = vsel %vm843, %v720, 256
      %v908 = vsel %vm844, %v720, 256
      %v909 = vsel %vm845, %v721, 256
      %v910 = vsel %vm846, %v721, 256
      %v911 = vsel %vm847, %v722, 256
      %v912 = vsel %vm848, %v722, 256
      %v913 = vsel %vm849, %v723, 256
      %v914 = vsel %vm850, %v723, 256
      %v915 = vsel %vm851, %v724, 256
      %v916 = vsel %vm852, %v724, 256
      %v917 = vsel %vm853, %v725, 256
      %v918 = vsel %vm854, %v725, 256
      %v919 = vsel %vm855, %v726, 256
      %v920 = vsel %vm856, %v726, 256
      %v921 = vsel %vm857, %v727, 256
      %v922 = vsel %vm858, %v727, 256
      %v923 = vsel %vm859, %v728, 256
      %v924 = vsel %vm860, %v728, 256
      %v925 = vsel %vm861, %v729, 256
      %v926 = vsel %vm862, %v729, 256
      %v927 = vsel %vm863, %v730, 256
      %v928 = vsel %vm864, %v730, 256
      %v929 = vsel %vm865, %v731, 256
      %v930 = vsel %vm866, %v731, 256
      %v931 = vsel %vm867, %v732, 256
      %v932 = vsel %vm868, %v732, 256
      %v933 = vsel %vm869, %v733, 256
      %v934 = vsel %vm870, %v733, 256
      %v935 = vsel %vm871, %v734, 256
      %v936 = vsel %vm872, %v734, 256
      %vm937 = vcmp.lt.s32.totalorder %v873, %v877
      %v938 = vsel %vm937, %v873, %v877
      %vm939 = vcmp.lt.s32.totalorder %v875, %v879
      %v940 = vsel %vm939, %v875, %v879
      %vm941 = vcmp.lt.s32.totalorder %v938, %v881
      %v942 = vsel %vm941, %v938, %v881
      %vm943 = vcmp.lt.s32.totalorder %v940, %v883
      %v944 = vsel %vm943, %v940, %v883
      %vm945 = vcmp.lt.s32.totalorder %v942, %v885
      %v946 = vsel %vm945, %v942, %v885
      %vm947 = vcmp.lt.s32.totalorder %v944, %v887
      %v948 = vsel %vm947, %v944, %v887
      %vm949 = vcmp.lt.s32.totalorder %v946, %v889
      %v950 = vsel %vm949, %v946, %v889
      %vm951 = vcmp.lt.s32.totalorder %v948, %v891
      %v952 = vsel %vm951, %v948, %v891
      %vm953 = vcmp.lt.s32.totalorder %v950, %v893
      %v954 = vsel %vm953, %v950, %v893
      %vm955 = vcmp.lt.s32.totalorder %v952, %v895
      %v956 = vsel %vm955, %v952, %v895
      %vm957 = vcmp.lt.s32.totalorder %v954, %v897
      %v958 = vsel %vm957, %v954, %v897
      %vm959 = vcmp.lt.s32.totalorder %v956, %v899
      %v960 = vsel %vm959, %v956, %v899
      %vm961 = vcmp.lt.s32.totalorder %v958, %v901
      %v962 = vsel %vm961, %v958, %v901
      %vm963 = vcmp.lt.s32.totalorder %v960, %v903
      %v964 = vsel %vm963, %v960, %v903
      %vm965 = vcmp.lt.s32.totalorder %v962, %v905
      %v966 = vsel %vm965, %v962, %v905
      %vm967 = vcmp.lt.s32.totalorder %v964, %v907
      %v968 = vsel %vm967, %v964, %v907
      %vm969 = vcmp.lt.s32.totalorder %v966, %v909
      %v970 = vsel %vm969, %v966, %v909
      %vm971 = vcmp.lt.s32.totalorder %v968, %v911
      %v972 = vsel %vm971, %v968, %v911
      %vm973 = vcmp.lt.s32.totalorder %v970, %v913
      %v974 = vsel %vm973, %v970, %v913
      %vm975 = vcmp.lt.s32.totalorder %v972, %v915
      %v976 = vsel %vm975, %v972, %v915
      %vm977 = vcmp.lt.s32.totalorder %v974, %v917
      %v978 = vsel %vm977, %v974, %v917
      %vm979 = vcmp.lt.s32.totalorder %v976, %v919
      %v980 = vsel %vm979, %v976, %v919
      %vm981 = vcmp.lt.s32.totalorder %v978, %v921
      %v982 = vsel %vm981, %v978, %v921
      %vm983 = vcmp.lt.s32.totalorder %v980, %v923
      %v984 = vsel %vm983, %v980, %v923
      %vm985 = vcmp.lt.s32.totalorder %v982, %v925
      %v986 = vsel %vm985, %v982, %v925
      %vm987 = vcmp.lt.s32.totalorder %v984, %v927
      %v988 = vsel %vm987, %v984, %v927
      %vm989 = vcmp.lt.s32.totalorder %v986, %v929
      %v990 = vsel %vm989, %v986, %v929
      %vm991 = vcmp.lt.s32.totalorder %v988, %v931
      %v992 = vsel %vm991, %v988, %v931
      %vm993 = vcmp.lt.s32.totalorder %v990, %v933
      %v994 = vsel %vm993, %v990, %v933
      %vm995 = vcmp.lt.s32.totalorder %v992, %v935
      %v996 = vsel %vm995, %v992, %v935
      %vm997 = vcmp.lt.s32.totalorder %v994, %v996
      %v998 = vsel %vm997, %v994, %v996
      %v999 = vrot.slane %v998, 4
      %vm1000 = vcmp.lt.s32.totalorder %v998, %v999
      %v1001 = vsel %vm1000, %v998, %v999
      %v1002 = vrot.slane %v1001, 2
      %vm1003 = vcmp.lt.s32.totalorder %v1001, %v1002
      %v1004 = vsel %vm1003, %v1001, %v1002
      %v1005 = vrot.slane %v1004, 1
      %vm1006 = vcmp.lt.s32.totalorder %v1004, %v1005
      %v1007 = vsel %vm1006, %v1004, %v1005
      %vm1008 = vcmp.lt.s32.totalorder %v874, %v878
      %v1009 = vsel %vm1008, %v874, %v878
      %vm1010 = vcmp.lt.s32.totalorder %v876, %v880
      %v1011 = vsel %vm1010, %v876, %v880
      %vm1012 = vcmp.lt.s32.totalorder %v1009, %v882
      %v1013 = vsel %vm1012, %v1009, %v882
      %vm1014 = vcmp.lt.s32.totalorder %v1011, %v884
      %v1015 = vsel %vm1014, %v1011, %v884
      %vm1016 = vcmp.lt.s32.totalorder %v1013, %v886
      %v1017 = vsel %vm1016, %v1013, %v886
      %vm1018 = vcmp.lt.s32.totalorder %v1015, %v888
      %v1019 = vsel %vm1018, %v1015, %v888
      %vm1020 = vcmp.lt.s32.totalorder %v1017, %v890
      %v1021 = vsel %vm1020, %v1017, %v890
      %vm1022 = vcmp.lt.s32.totalorder %v1019, %v892
      %v1023 = vsel %vm1022, %v1019, %v892
      %vm1024 = vcmp.lt.s32.totalorder %v1021, %v894
      %v1025 = vsel %vm1024, %v1021, %v894
      %vm1026 = vcmp.lt.s32.totalorder %v1023, %v896
      %v1027 = vsel %vm1026, %v1023, %v896
      %vm1028 = vcmp.lt.s32.totalorder %v1025, %v898
      %v1029 = vsel %vm1028, %v1025, %v898
      %vm1030 = vcmp.lt.s32.totalorder %v1027, %v900
      %v1031 = vsel %vm1030, %v1027, %v900
      %vm1032 = vcmp.lt.s32.totalorder %v1029, %v902
      %v1033 = vsel %vm1032, %v1029, %v902
      %vm1034 = vcmp.lt.s32.totalorder %v1031, %v904
      %v1035 = vsel %vm1034, %v1031, %v904
      %vm1036 = vcmp.lt.s32.totalorder %v1033, %v906
      %v1037 = vsel %vm1036, %v1033, %v906
      %vm1038 = vcmp.lt.s32.totalorder %v1035, %v908
      %v1039 = vsel %vm1038, %v1035, %v908
      %vm1040 = vcmp.lt.s32.totalorder %v1037, %v910
      %v1041 = vsel %vm1040, %v1037, %v910
      %vm1042 = vcmp.lt.s32.totalorder %v1039, %v912
      %v1043 = vsel %vm1042, %v1039, %v912
      %vm1044 = vcmp.lt.s32.totalorder %v1041, %v914
      %v1045 = vsel %vm1044, %v1041, %v914
      %vm1046 = vcmp.lt.s32.totalorder %v1043, %v916
      %v1047 = vsel %vm1046, %v1043, %v916
      %vm1048 = vcmp.lt.s32.totalorder %v1045, %v918
      %v1049 = vsel %vm1048, %v1045, %v918
      %vm1050 = vcmp.lt.s32.totalorder %v1047, %v920
      %v1051 = vsel %vm1050, %v1047, %v920
      %vm1052 = vcmp.lt.s32.totalorder %v1049, %v922
      %v1053 = vsel %vm1052, %v1049, %v922
      %vm1054 = vcmp.lt.s32.totalorder %v1051, %v924
      %v1055 = vsel %vm1054, %v1051, %v924
      %vm1056 = vcmp.lt.s32.totalorder %v1053, %v926
      %v1057 = vsel %vm1056, %v1053, %v926
      %vm1058 = vcmp.lt.s32.totalorder %v1055, %v928
      %v1059 = vsel %vm1058, %v1055, %v928
      %vm1060 = vcmp.lt.s32.totalorder %v1057, %v930
      %v1061 = vsel %vm1060, %v1057, %v930
      %vm1062 = vcmp.lt.s32.totalorder %v1059, %v932
      %v1063 = vsel %vm1062, %v1059, %v932
      %vm1064 = vcmp.lt.s32.totalorder %v1061, %v934
      %v1065 = vsel %vm1064, %v1061, %v934
      %vm1066 = vcmp.lt.s32.totalorder %v1063, %v936
      %v1067 = vsel %vm1066, %v1063, %v936
      %vm1068 = vcmp.lt.s32.totalorder %v1065, %v1067
      %v1069 = vsel %vm1068, %v1065, %v1067
      %v1070 = vrot.slane %v1069, 4
      %vm1071 = vcmp.lt.s32.totalorder %v1069, %v1070
      %v1072 = vsel %vm1071, %v1069, %v1070
      %v1073 = vrot.slane %v1072, 2
      %vm1074 = vcmp.lt.s32.totalorder %v1072, %v1073
      %v1075 = vsel %vm1074, %v1072, %v1073
      %v1076 = vrot.slane %v1075, 1
      %vm1077 = vcmp.lt.s32.totalorder %v1075, %v1076
      %v1078 = vsel %vm1077, %v1075, %v1076
      %vm1079 = vcmp.eq.s32.totalorder %v873, %v1007
      %vm1080 = vcmp.eq.s32.totalorder %v874, %v1078
      %vm1081 = vcmp.eq.s32.totalorder %v875, %v1007
      %vm1082 = vcmp.eq.s32.totalorder %v876, %v1078
      %vm1083 = vcmp.eq.s32.totalorder %v877, %v1007
      %vm1084 = vcmp.eq.s32.totalorder %v878, %v1078
      %vm1085 = vcmp.eq.s32.totalorder %v879, %v1007
      %vm1086 = vcmp.eq.s32.totalorder %v880, %v1078
      %vm1087 = vcmp.eq.s32.totalorder %v881, %v1007
      %vm1088 = vcmp.eq.s32.totalorder %v882, %v1078
      %vm1089 = vcmp.eq.s32.totalorder %v883, %v1007
      %vm1090 = vcmp.eq.s32.totalorder %v884, %v1078
      %vm1091 = vcmp.eq.s32.totalorder %v885, %v1007
      %vm1092 = vcmp.eq.s32.totalorder %v886, %v1078
      %vm1093 = vcmp.eq.s32.totalorder %v887, %v1007
      %vm1094 = vcmp.eq.s32.totalorder %v888, %v1078
      %vm1095 = vcmp.eq.s32.totalorder %v889, %v1007
      %vm1096 = vcmp.eq.s32.totalorder %v890, %v1078
      %vm1097 = vcmp.eq.s32.totalorder %v891, %v1007
      %vm1098 = vcmp.eq.s32.totalorder %v892, %v1078
      %vm1099 = vcmp.eq.s32.totalorder %v893, %v1007
      %vm1100 = vcmp.eq.s32.totalorder %v894, %v1078
      %vm1101 = vcmp.eq.s32.totalorder %v895, %v1007
      %vm1102 = vcmp.eq.s32.totalorder %v896, %v1078
      %vm1103 = vcmp.eq.s32.totalorder %v897, %v1007
      %vm1104 = vcmp.eq.s32.totalorder %v898, %v1078
      %vm1105 = vcmp.eq.s32.totalorder %v899, %v1007
      %vm1106 = vcmp.eq.s32.totalorder %v900, %v1078
      %vm1107 = vcmp.eq.s32.totalorder %v901, %v1007
      %vm1108 = vcmp.eq.s32.totalorder %v902, %v1078
      %vm1109 = vcmp.eq.s32.totalorder %v903, %v1007
      %vm1110 = vcmp.eq.s32.totalorder %v904, %v1078
      %vm1111 = vcmp.eq.s32.totalorder %v905, %v1007
      %vm1112 = vcmp.eq.s32.totalorder %v906, %v1078
      %vm1113 = vcmp.eq.s32.totalorder %v907, %v1007
      %vm1114 = vcmp.eq.s32.totalorder %v908, %v1078
      %vm1115 = vcmp.eq.s32.totalorder %v909, %v1007
      %vm1116 = vcmp.eq.s32.totalorder %v910, %v1078
      %vm1117 = vcmp.eq.s32.totalorder %v911, %v1007
      %vm1118 = vcmp.eq.s32.totalorder %v912, %v1078
      %vm1119 = vcmp.eq.s32.totalorder %v913, %v1007
      %vm1120 = vcmp.eq.s32.totalorder %v914, %v1078
      %vm1121 = vcmp.eq.s32.totalorder %v915, %v1007
      %vm1122 = vcmp.eq.s32.totalorder %v916, %v1078
      %vm1123 = vcmp.eq.s32.totalorder %v917, %v1007
      %vm1124 = vcmp.eq.s32.totalorder %v918, %v1078
      %vm1125 = vcmp.eq.s32.totalorder %v919, %v1007
      %vm1126 = vcmp.eq.s32.totalorder %v920, %v1078
      %vm1127 = vcmp.eq.s32.totalorder %v921, %v1007
      %vm1128 = vcmp.eq.s32.totalorder %v922, %v1078
      %vm1129 = vcmp.eq.s32.totalorder %v923, %v1007
      %vm1130 = vcmp.eq.s32.totalorder %v924, %v1078
      %vm1131 = vcmp.eq.s32.totalorder %v925, %v1007
      %vm1132 = vcmp.eq.s32.totalorder %v926, %v1078
      %vm1133 = vcmp.eq.s32.totalorder %v927, %v1007
      %vm1134 = vcmp.eq.s32.totalorder %v928, %v1078
      %vm1135 = vcmp.eq.s32.totalorder %v929, %v1007
      %vm1136 = vcmp.eq.s32.totalorder %v930, %v1078
      %vm1137 = vcmp.eq.s32.totalorder %v931, %v1007
      %vm1138 = vcmp.eq.s32.totalorder %v932, %v1078
      %vm1139 = vcmp.eq.s32.totalorder %v933, %v1007
      %vm1140 = vcmp.eq.s32.totalorder %v934, %v1078
      %vm1141 = vcmp.eq.s32.totalorder %v935, %v1007
      %vm1142 = vcmp.eq.s32.totalorder %v936, %v1078
      %v1143 = vsel %vm1079, 1, 0
      %v1144 = vsel %vm1080, 1, 0
      %v1145 = vsel %vm1081, 1, 0
      %v1146 = vsel %vm1082, 1, 0
      %v1147 = vsel %vm1083, 1, 0
      %v1148 = vsel %vm1084, 1, 0
      %v1149 = vsel %vm1085, 1, 0
      %v1150 = vsel %vm1086, 1, 0
      %v1151 = vsel %vm1087, 1, 0
      %v1152 = vsel %vm1088, 1, 0
      %v1153 = vsel %vm1089, 1, 0
      %v1154 = vsel %vm1090, 1, 0
      %v1155 = vsel %vm1091, 1, 0
      %v1156 = vsel %vm1092, 1, 0
      %v1157 = vsel %vm1093, 1, 0
      %v1158 = vsel %vm1094, 1, 0
      %v1159 = vsel %vm1095, 1, 0
      %v1160 = vsel %vm1096, 1, 0
      %v1161 = vsel %vm1097, 1, 0
      %v1162 = vsel %vm1098, 1, 0
      %v1163 = vsel %vm1099, 1, 0
      %v1164 = vsel %vm1100, 1, 0
      %v1165 = vsel %vm1101, 1, 0
      %v1166 = vsel %vm1102, 1, 0
      %v1167 = vsel %vm1103, 1, 0
      %v1168 = vsel %vm1104, 1, 0
      %v1169 = vsel %vm1105, 1, 0
      %v1170 = vsel %vm1106, 1, 0
      %v1171 = vsel %vm1107, 1, 0
      %v1172 = vsel %vm1108, 1, 0
      %v1173 = vsel %vm1109, 1, 0
      %v1174 = vsel %vm1110, 1, 0
      %v1175 = vsel %vm1111, 1, 0
      %v1176 = vsel %vm1112, 1, 0
      %v1177 = vsel %vm1113, 1, 0
      %v1178 = vsel %vm1114, 1, 0
      %v1179 = vsel %vm1115, 1, 0
      %v1180 = vsel %vm1116, 1, 0
      %v1181 = vsel %vm1117, 1, 0
      %v1182 = vsel %vm1118, 1, 0
      %v1183 = vsel %vm1119, 1, 0
      %v1184 = vsel %vm1120, 1, 0
      %v1185 = vsel %vm1121, 1, 0
      %v1186 = vsel %vm1122, 1, 0
      %v1187 = vsel %vm1123, 1, 0
      %v1188 = vsel %vm1124, 1, 0
      %v1189 = vsel %vm1125, 1, 0
      %v1190 = vsel %vm1126, 1, 0
      %v1191 = vsel %vm1127, 1, 0
      %v1192 = vsel %vm1128, 1, 0
      %v1193 = vsel %vm1129, 1, 0
      %v1194 = vsel %vm1130, 1, 0
      %v1195 = vsel %vm1131, 1, 0
      %v1196 = vsel %vm1132, 1, 0
      %v1197 = vsel %vm1133, 1, 0
      %v1198 = vsel %vm1134, 1, 0
      %v1199 = vsel %vm1135, 1, 0
      %v1200 = vsel %vm1136, 1, 0
      %v1201 = vsel %vm1137, 1, 0
      %v1202 = vsel %vm1138, 1, 0
      %v1203 = vsel %vm1139, 1, 0
      %v1204 = vsel %vm1140, 1, 0
      %v1205 = vsel %vm1141, 1, 0
      %v1206 = vsel %vm1142, 1, 0
      %v1207 = vcvt.s32.f32 %v1143
      %v1208 = vcvt.s32.f32 %v1144
      %v1209 = vcvt.s32.f32 %v1145
      %v1210 = vcvt.s32.f32 %v1146
      %v1211 = vcvt.s32.f32 %v1147
      %v1212 = vcvt.s32.f32 %v1148
      %v1213 = vcvt.s32.f32 %v1149
      %v1214 = vcvt.s32.f32 %v1150
      %v1215 = vcvt.s32.f32 %v1151
      %v1216 = vcvt.s32.f32 %v1152
      %v1217 = vcvt.s32.f32 %v1153
      %v1218 = vcvt.s32.f32 %v1154
      %v1219 = vcvt.s32.f32 %v1155
      %v1220 = vcvt.s32.f32 %v1156
      %v1221 = vcvt.s32.f32 %v1157
      %v1222 = vcvt.s32.f32 %v1158
      %v1223 = vcvt.s32.f32 %v1159
      %v1224 = vcvt.s32.f32 %v1160
      %v1225 = vcvt.s32.f32 %v1161
      %v1226 = vcvt.s32.f32 %v1162
      %v1227 = vcvt.s32.f32 %v1163
      %v1228 = vcvt.s32.f32 %v1164
      %v1229 = vcvt.s32.f32 %v1165
      %v1230 = vcvt.s32.f32 %v1166
      %v1231 = vcvt.s32.f32 %v1167
      %v1232 = vcvt.s32.f32 %v1168
      %v1233 = vcvt.s32.f32 %v1169
      %v1234 = vcvt.s32.f32 %v1170
      %v1235 = vcvt.s32.f32 %v1171
      %v1236 = vcvt.s32.f32 %v1172
      %v1237 = vcvt.s32.f32 %v1173
      %v1238 = vcvt.s32.f32 %v1174
      %v1239 = vcvt.s32.f32 %v1175
      %v1240 = vcvt.s32.f32 %v1176
      %v1241 = vcvt.s32.f32 %v1177
      %v1242 = vcvt.s32.f32 %v1178
      %v1243 = vcvt.s32.f32 %v1179
      %v1244 = vcvt.s32.f32 %v1180
      %v1245 = vcvt.s32.f32 %v1181
      %v1246 = vcvt.s32.f32 %v1182
      %v1247 = vcvt.s32.f32 %v1183
      %v1248 = vcvt.s32.f32 %v1184
      %v1249 = vcvt.s32.f32 %v1185
      %v1250 = vcvt.s32.f32 %v1186
      %v1251 = vcvt.s32.f32 %v1187
      %v1252 = vcvt.s32.f32 %v1188
      %v1253 = vcvt.s32.f32 %v1189
      %v1254 = vcvt.s32.f32 %v1190
      %v1255 = vcvt.s32.f32 %v1191
      %v1256 = vcvt.s32.f32 %v1192
      %v1257 = vcvt.s32.f32 %v1193
      %v1258 = vcvt.s32.f32 %v1194
      %v1259 = vcvt.s32.f32 %v1195
      %v1260 = vcvt.s32.f32 %v1196
      %v1261 = vcvt.s32.f32 %v1197
      %v1262 = vcvt.s32.f32 %v1198
      %v1263 = vcvt.s32.f32 %v1199
      %v1264 = vcvt.s32.f32 %v1200
      %v1265 = vcvt.s32.f32 %v1201
      %v1266 = vcvt.s32.f32 %v1202
      %v1267 = vcvt.s32.f32 %v1203
      %v1268 = vcvt.s32.f32 %v1204
      %v1269 = vcvt.s32.f32 %v1205
      %v1270 = vcvt.s32.f32 %v1206
      %v1271 = vld [vmem:[%s2] sm:$0xff]
      %v1272 = vld [vmem:[%s2 + $0x8] sm:$0xff]
      %v1273 = vld [vmem:[%s2 + $0x10] sm:$0xff]
      %v1274 = vld [vmem:[%s2 + $0x18] sm:$0xff]
      %v1275 = vld [vmem:[%s2 + $0x20] sm:$0xff]
      %v1276 = vld [vmem:[%s2 + $0x28] sm:$0xff]
      %v1277 = vld [vmem:[%s2 + $0x30] sm:$0xff]
      %v1278 = vld [vmem:[%s2 + $0x38] sm:$0xff]
      %v1279 = vld [vmem:[%s2 + $0x40] sm:$0xff]
      %v1280 = vld [vmem:[%s2 + $0x48] sm:$0xff]
      %v1281 = vld [vmem:[%s2 + $0x50] sm:$0xff]
      %v1282 = vld [vmem:[%s2 + $0x58] sm:$0xff]
      %v1283 = vld [vmem:[%s2 + $0x60] sm:$0xff]
      %v1284 = vld [vmem:[%s2 + $0x68] sm:$0xff]
      %v1285 = vld [vmem:[%s2 + $0x70] sm:$0xff]
      %v1286 = vld [vmem:[%s2 + $0x78] sm:$0xff]
      %v1287 = vld [vmem:[%s2 + $0x80] sm:$0xff]
      %v1288 = vld [vmem:[%s2 + $0x88] sm:$0xff]
      %v1289 = vld [vmem:[%s2 + $0x90] sm:$0xff]
      %v1290 = vld [vmem:[%s2 + $0x98] sm:$0xff]
      %v1291 = vld [vmem:[%s2 + $0xa0] sm:$0xff]
      %v1292 = vld [vmem:[%s2 + $0xa8] sm:$0xff]
      %v1293 = vld [vmem:[%s2 + $0xb0] sm:$0xff]
      %v1294 = vld [vmem:[%s2 + $0xb8] sm:$0xff]
      %v1295 = vld [vmem:[%s2 + $0xc0] sm:$0xff]
      %v1296 = vld [vmem:[%s2 + $0xc8] sm:$0xff]
      %v1297 = vld [vmem:[%s2 + $0xd0] sm:$0xff]
      %v1298 = vld [vmem:[%s2 + $0xd8] sm:$0xff]
      %v1299 = vld [vmem:[%s2 + $0xe0] sm:$0xff]
      %v1300 = vld [vmem:[%s2 + $0xe8] sm:$0xff]
      %v1301 = vld [vmem:[%s2 + $0xf0] sm:$0xff]
      %v1302 = vld [vmem:[%s2 + $0xf8] sm:$0xff]
      %1303 = vxpose.xlu0.b32.start [1/16] %v1271, 128
      %1304 = vxpose.xlu0.b32.cont [2/16] %v1272, 128
      %1305 = vxpose.xlu0.b32.cont [3/16] %v1273, 128
      %1306 = vxpose.xlu0.b32.cont [4/16] %v1274, 128
      %1307 = vxpose.xlu0.b32.cont [5/16] %v1275, 128
      %1308 = vxpose.xlu0.b32.cont [6/16] %v1276, 128
      %1309 = vxpose.xlu0.b32.cont [7/16] %v1277, 128
      %1310 = vxpose.xlu0.b32.cont [8/16] %v1278, 128
      %1311 = vxpose.xlu0.b32.cont [9/16] %v1279, 128
      %1312 = vxpose.xlu0.b32.cont [10/16] %v1280, 128
      %1313 = vxpose.xlu0.b32.cont [11/16] %v1281, 128
      %1314 = vxpose.xlu0.b32.cont [12/16] %v1282, 128
      %1315 = vxpose.xlu0.b32.cont [13/16] %v1283, 128
      %1316 = vxpose.xlu0.b32.cont [14/16] %v1284, 128
      %1317 = vxpose.xlu0.b32.cont [15/16] %v1285, 128
      %1318 = vxpose.xlu0.b32.end [16/16] %v1286, 128
      %v1319 = vpop.trf.xlu0
      %v1320 = vpop.trf.xlu0
      %v1321 = vpop.trf.xlu0
      %v1322 = vpop.trf.xlu0
      %v1323 = vpop.trf.xlu0
      %v1324 = vpop.trf.xlu0
      %v1325 = vpop.trf.xlu0
      %v1326 = vpop.trf.xlu0
      %v1327 = vpop.trf.xlu0
      %v1328 = vpop.trf.xlu0
      %v1329 = vpop.trf.xlu0
      %v1330 = vpop.trf.xlu0
      %v1331 = vpop.trf.xlu0
      %v1332 = vpop.trf.xlu0
      %v1333 = vpop.trf.xlu0
      %v1334 = vpop.trf.xlu0
      %1335 = vxpose.xlu0.b32.start [1/16] %v1287, 128
      %1336 = vxpose.xlu0.b32.cont [2/16] %v1288, 128
      %1337 = vxpose.xlu0.b32.cont [3/16] %v1289, 128
      %1338 = vxpose.xlu0.b32.cont [4/16] %v1290, 128
      %1339 = vxpose.xlu0.b32.cont [5/16] %v1291, 128
      %1340 = vxpose.xlu0.b32.cont [6/16] %v1292, 128
      %1341 = vxpose.xlu0.b32.cont [7/16] %v1293, 128
      %1342 = vxpose.xlu0.b32.cont [8/16] %v1294, 128
      %1343 = vxpose.xlu0.b32.cont [9/16] %v1295, 128
      %1344 = vxpose.xlu0.b32.cont [10/16] %v1296, 128
      %1345 = vxpose.xlu0.b32.cont [11/16] %v1297, 128
      %1346 = vxpose.xlu0.b32.cont [12/16] %v1298, 128
      %1347 = vxpose.xlu0.b32.cont [13/16] %v1299, 128
      %1348 = vxpose.xlu0.b32.cont [14/16] %v1300, 128
      %1349 = vxpose.xlu0.b32.cont [15/16] %v1301, 128
      %1350 = vxpose.xlu0.b32.end [16/16] %v1302, 128
      %v1351 = vpop.trf.xlu0
      %v1352 = vpop.trf.xlu0
      %v1353 = vpop.trf.xlu0
      %v1354 = vpop.trf.xlu0
      %v1355 = vpop.trf.xlu0
      %v1356 = vpop.trf.xlu0
      %v1357 = vpop.trf.xlu0
      %v1358 = vpop.trf.xlu0
      %v1359 = vpop.trf.xlu0
      %v1360 = vpop.trf.xlu0
      %v1361 = vpop.trf.xlu0
      %v1362 = vpop.trf.xlu0
      %v1363 = vpop.trf.xlu0
      %v1364 = vpop.trf.xlu0
      %v1365 = vpop.trf.xlu0
      %v1366 = vpop.trf.xlu0
      %1367 = vmatpush.msra.mxu0 %v1237
      %1368 = vmatpush.msra.mxu0 %v1235
      %1369 = vmatpush.msra.mxu0 %v1233
      %1370 = vmatpush.msra.mxu0 %v1231
      %1371 = vmatpush.msra.mxu0 %v1229
      %1372 = vmatpush.msra.mxu0 %v1227
      %1373 = vmatpush.msra.mxu0 %v1225
      %1374 = vmatpush.msra.mxu0 %v1223
      %1375 = vmatpush.msra.mxu0 %v1221
      %1376 = vmatpush.msra.mxu0 %v1219
      %1377 = vmatpush.msra.mxu0 %v1217
      %1378 = vmatpush.msra.mxu0 %v1215
      %1379 = vmatpush.msra.mxu0 %v1213
      %1380 = vmatpush.msra.mxu0 %v1211
      %1381 = vmatpush.msra.mxu0 %v1209
      %1382 = vmatpush.msra.mxu0 %v1207
      %1383 = vmatmul.f32.gmra.mxu0 %v1319
      %v1384 = vpop.f32.mrf.mxu0
      %v1385 = vadd.f32 0.0, %v1384
      %1386 = vmatmul.f32.gmra.mxu0 %v1320
      %v1387 = vpop.f32.mrf.mxu0
      %v1388 = vadd.f32 0.0, %v1387
      %1389 = vmatmul.f32.gmra.mxu0 %v1321
      %v1390 = vpop.f32.mrf.mxu0
      %v1391 = vadd.f32 0.0, %v1390
      %1392 = vmatmul.f32.gmra.mxu0 %v1322
      %v1393 = vpop.f32.mrf.mxu0
      %v1394 = vadd.f32 0.0, %v1393
      %1395 = vdwg.mxu0
      %1396 = vmatpush.msra.mxu0 %v1269
      %1397 = vmatpush.msra.mxu0 %v1267
      %1398 = vmatpush.msra.mxu0 %v1265
      %1399 = vmatpush.msra.mxu0 %v1263
      %1400 = vmatpush.msra.mxu0 %v1261
      %1401 = vmatpush.msra.mxu0 %v1259
      %1402 = vmatpush.msra.mxu0 %v1257
      %1403 = vmatpush.msra.mxu0 %v1255
      %1404 = vmatpush.msra.mxu0 %v1253
      %1405 = vmatpush.msra.mxu0 %v1251
      %1406 = vmatpush.msra.mxu0 %v1249
      %1407 = vmatpush.msra.mxu0 %v1247
      %1408 = vmatpush.msra.mxu0 %v1245
      %1409 = vmatpush.msra.mxu0 %v1243
      %1410 = vmatpush.msra.mxu0 %v1241
      %1411 = vmatpush.msra.mxu0 %v1239
      %1412 = vmatmul.f32.gmra.mxu0 %v1351
      %v1413 = vpop.f32.mrf.mxu0
      %v1414 = vadd.f32 %v1385, %v1413
      %1415 = vmatmul.f32.gmra.mxu0 %v1352
      %v1416 = vpop.f32.mrf.mxu0
      %v1417 = vadd.f32 %v1388, %v1416
      %1418 = vmatmul.f32.gmra.mxu0 %v1353
      %v1419 = vpop.f32.mrf.mxu0
      %v1420 = vadd.f32 %v1391, %v1419
      %1421 = vmatmul.f32.gmra.mxu0 %v1354
      %v1422 = vpop.f32.mrf.mxu0
      %v1423 = vadd.f32 %v1394, %v1422
      %1424 = vdwg.mxu0
      %1425 = vmatpush.msra.mxu0 %v1238
      %1426 = vmatpush.msra.mxu0 %v1236
      %1427 = vmatpush.msra.mxu0 %v1234
      %1428 = vmatpush.msra.mxu0 %v1232
      %1429 = vmatpush.msra.mxu0 %v1230
      %1430 = vmatpush.msra.mxu0 %v1228
      %1431 = vmatpush.msra.mxu0 %v1226
      %1432 = vmatpush.msra.mxu0 %v1224
      %1433 = vmatpush.msra.mxu0 %v1222
      %1434 = vmatpush.msra.mxu0 %v1220
      %1435 = vmatpush.msra.mxu0 %v1218
      %1436 = vmatpush.msra.mxu0 %v1216
      %1437 = vmatpush.msra.mxu0 %v1214
      %1438 = vmatpush.msra.mxu0 %v1212
      %1439 = vmatpush.msra.mxu0 %v1210
      %1440 = vmatpush.msra.mxu0 %v1208
      %1441 = vmatmul.f32.gmra.mxu0 %v1319
      %v1442 = vpop.f32.mrf.mxu0
      %v1443 = vadd.f32 0.0, %v1442
      %1444 = vmatmul.f32.gmra.mxu0 %v1320
      %v1445 = vpop.f32.mrf.mxu0
      %v1446 = vadd.f32 0.0, %v1445
      %1447 = vmatmul.f32.gmra.mxu0 %v1321
      %v1448 = vpop.f32.mrf.mxu0
      %v1449 = vadd.f32 0.0, %v1448
      %1450 = vmatmul.f32.gmra.mxu0 %v1322
      %v1451 = vpop.f32.mrf.mxu0
      %v1452 = vadd.f32 0.0, %v1451
      %1453 = vdwg.mxu0
      %1454 = vmatpush.msra.mxu0 %v1270
      %1455 = vmatpush.msra.mxu0 %v1268
      %1456 = vmatpush.msra.mxu0 %v1266
      %1457 = vmatpush.msra.mxu0 %v1264
      %1458 = vmatpush.msra.mxu0 %v1262
      %1459 = vmatpush.msra.mxu0 %v1260
      %1460 = vmatpush.msra.mxu0 %v1258
      %1461 = vmatpush.msra.mxu0 %v1256
      %1462 = vmatpush.msra.mxu0 %v1254
      %1463 = vmatpush.msra.mxu0 %v1252
      %1464 = vmatpush.msra.mxu0 %v1250
      %1465 = vmatpush.msra.mxu0 %v1248
      %1466 = vmatpush.msra.mxu0 %v1246
      %1467 = vmatpush.msra.mxu0 %v1244
      %1468 = vmatpush.msra.mxu0 %v1242
      %1469 = vmatpush.msra.mxu0 %v1240
      %1470 = vmatmul.f32.gmra.mxu0 %v1351
      %v1471 = vpop.f32.mrf.mxu0
      %v1472 = vadd.f32 %v1443, %v1471
      %1473 = vmatmul.f32.gmra.mxu0 %v1352
      %v1474 = vpop.f32.mrf.mxu0
      %v1475 = vadd.f32 %v1446, %v1474
      %1476 = vmatmul.f32.gmra.mxu0 %v1353
      %v1477 = vpop.f32.mrf.mxu0
      %v1478 = vadd.f32 %v1449, %v1477
      %1479 = vmatmul.f32.gmra.mxu0 %v1354
      %v1480 = vpop.f32.mrf.mxu0
      %v1481 = vadd.f32 %v1452, %v1480
      %1482 = vdwg.mxu0
      %1483 = vst [vmem:[%s287] sm:$0xff] %v1414
      %1484 = vst [vmem:[%s287 + $0x8] sm:$0xff] %v1472
      %1485 = vst [vmem:[%s287 + $0x10] sm:$0xff] %v1417
      %1486 = vst [vmem:[%s287 + $0x18] sm:$0xff] %v1475
      %1487 = vst [vmem:[%s287 + $0x20] sm:$0xff] %v1420
      %1488 = vst [vmem:[%s287 + $0x28] sm:$0xff] %v1478
      %1489 = vst [vmem:[%s287 + $0x30] sm:$0xff] %v1423
      %1490 = vst [vmem:[%s287 + $0x38] sm:$0xff] %v1481
      %v1491 = vrot.slane %v1078, 7
      %vm1492 = vcmask 1040384
      %v1493 = vsel %vm1492, %v1007, %v1491
      %v1494 = vlaneseq
      %vm1495 = vcmp.ge.s32.totalorder %v1494, 0
      %vm1496 = vcmp.lt.s32.totalorder %v1494, 256
      %vm1497 = vmand %vm1495, %vm1496
      %1498 = vst.msk [vmem:[%s296] sm:$0x3] %vm1497, %v1493
      %v1499 = vmul.f32 %v309, %v309
      %v1500 = vmul.f32 %v310, %v310
      %v1501 = vmul.f32 %v311, %v311
      %v1502 = vmul.f32 %v312, %v312
      %v1503 = vmul.f32 %v313, %v313
      %v1504 = vmul.f32 %v314, %v314
      %v1505 = vmul.f32 %v315, %v315
      %v1506 = vmul.f32 %v316, %v316
      %v1507 = vadd.f32 %v1499, %v1501
      %v1508 = vadd.f32 %v1507, %v1503
      %v1509 = vadd.f32 %v1508, %v1505
      %v1510 = vrot.slane %v1509, 4
      %v1511 = vadd.f32 %v1509, %v1510
      %v1512 = vrot.slane %v1511, 2
      %v1513 = vadd.f32 %v1511, %v1512
      %v1514 = vrot.slane %v1513, 1
      %v1515 = vadd.f32 %v1513, %v1514
      %v1516 = vadd.f32 %v1500, %v1502
      %v1517 = vadd.f32 %v1516, %v1504
      %v1518 = vadd.f32 %v1517, %v1506
      %v1519 = vrot.slane %v1518, 4
      %v1520 = vadd.f32 %v1518, %v1519
      %v1521 = vrot.slane %v1520, 2
      %v1522 = vadd.f32 %v1520, %v1521
      %v1523 = vrot.slane %v1522, 1
      %v1524 = vadd.f32 %v1522, %v1523
      %v1525 = vadd.f32 %v1515, %v771
      %v1526 = vadd.f32 %v1524, %v808
      %v1527 = vmax.f32 %v1525, 0.0
      %v1528 = vmax.f32 %v1526, 0.0
      %v1531 = vrot.slane %v1528, 7
      %v1532 = vsel %vm1492, %v1527, %v1531
      %1534 = vst.msk [vmem:[%s305] sm:$0x3] %vm1497, %v1532
      %s1535 = smul.u32 2, %s22
      %p1536 = scmp.lt.s32.totalorder %s21, 1
      %s1537 = scalar_select %p1536, %s21, 1
      %p1538 = scmp.lt.s32.totalorder %s1535, 1
      %s1539 = scalar_select %p1538, %s1535, 1
      %s1540 = smul.addr %s1537, 8
      %s1541 = sadd.s32 %s1539, %s1540
      %s1542 = smul.addr %s1541, 8
      %s1543 = scalar_lea.vmem %s3, %s1542
      %s1544 = smul.u32 2, %s22
      %p1545 = scmp.lt.s32.totalorder %s21, 1
      %s1546 = scalar_select %p1545, %s21, 1
      %p1547 = scmp.lt.s32.totalorder %s1544, 1
      %s1548 = scalar_select %p1547, %s1544, 1
      %s1549 = smul.addr %s1546, 2
      %s1550 = sadd.s32 %s1548, %s1549
      %s1551 = scalar_lea.vmem %s4, %s1550
      %s1552 = smul.u32 2, %s22
      %p1553 = scmp.lt.s32.totalorder %s21, 1
      %s1554 = scalar_select %p1553, %s21, 1
      %p1555 = scmp.lt.s32.totalorder %s1552, 1
      %s1556 = scalar_select %p1555, %s1552, 1
      %s1557 = smul.addr %s1554, 2
      %s1558 = sadd.s32 %s1556, %s1557
      %s1559 = scalar_lea.vmem %s5, %s1558
      // Predicated region
      $region33: #{mask_vector_quantize.1} parent=31 // pred_check
        %p1560 = pneg %p119
      $region34: #{mask_vector_quantize.1} parent=31 // pred_check_branch
        %1562 = sbr.rel (%p1560) target = $region36
      $region35: #{mask_vector_quantize.1} parent=31 // pred_region
        %s1563 = smul.u32 2, %s22
      $region36: #{mask_vector_quantize.1} parent=31 // pred_fallthru
        _
      // Predicated region
      $region37: #{mask_vector_quantize.1} parent=31 // pred_check
        %p1564 = pneg %p147
      $region38: #{mask_vector_quantize.1} parent=31 // pred_check_branch
        %1566 = sbr.rel (%p1564) target = $region40
      $region39: #{mask_vector_quantize.1} parent=31 // pred_region
        %s1567 = smul.u32 2, %s22
      $region40: #{mask_vector_quantize.1} parent=31 // pred_fallthru
        _
      // Predicated region
      $region41: #{mask_vector_quantize.1} parent=31 // pred_check
        %p1568 = pneg %p175
      $region42: #{mask_vector_quantize.1} parent=31 // pred_check_branch
        %1570 = sbr.rel (%p1568) target = $region44
      $region43: #{mask_vector_quantize.1} parent=31 // pred_region
        %s1571 = smul.u32 2, %s22
      $region44: #{mask_vector_quantize.1} parent=31 // pred_fallthru
        _
    $region32: #{mask_vector_quantize.1} parent=5 // pred_fallthru
      _
    %p1572 = scmp.le.s32.totalorder 2, %s12
    // Predicated region
    $region45: #{mask_vector_quantize.1} parent=5 // pred_check
      %p1573 = pneg %p1572
    $region46: #{mask_vector_quantize.1} parent=5 // pred_check_branch
      %1575 = sbr.rel (%p1573) target = $region48
    $region47: #{mask_vector_quantize.1} parent=5 // pred_region
      %s1576 = ssub.s32 %s12, 2
      // Predicated region
      $region49: #{mask_vector_quantize.1} parent=47 // pred_check
        %p1577 = pneg %p125
      $region50: #{mask_vector_quantize.1} parent=47 // pred_check_branch
        %1579 = sbr.rel (%p1577) target = $region52
      $region51: #{mask_vector_quantize.1} parent=47 // pred_region
        %s1580 = smul.u32 2, %s24
        %p1581 = scmp.lt.s32.totalorder %s23, 1
        %s1582 = scalar_select %p1581, %s23, 1
        %p1583 = scmp.lt.s32.totalorder %s1580, 1
        %s1584 = scalar_select %p1583, %s1580, 1
        %s1585 = smul.addr %s1582, 8
        %s1586 = sadd.s32 %s1584, %s1585
        %s1587 = smul.addr %s1586, 8
        %s1588 = scalar_lea.vmem %s3, %s1587
      $region52: #{mask_vector_quantize.1} parent=47 // pred_fallthru
        _
      // Predicated region
      $region53: #{mask_vector_quantize.1} parent=47 // pred_check
        %p1589 = pneg %p153
      $region54: #{mask_vector_quantize.1} parent=47 // pred_check_branch
        %1591 = sbr.rel (%p1589) target = $region56
      $region55: #{mask_vector_quantize.1} parent=47 // pred_region
        %s1592 = smul.u32 2, %s24
        %p1593 = scmp.lt.s32.totalorder %s23, 1
        %s1594 = scalar_select %p1593, %s23, 1
        %p1595 = scmp.lt.s32.totalorder %s1592, 1
        %s1596 = scalar_select %p1595, %s1592, 1
        %s1597 = smul.addr %s1594, 2
        %s1598 = sadd.s32 %s1596, %s1597
        %s1599 = scalar_lea.vmem %s4, %s1598
      $region56: #{mask_vector_quantize.1} parent=47 // pred_fallthru
        _
      // Predicated region
      $region57: #{mask_vector_quantize.1} parent=47 // pred_check
        %p1600 = pneg %p181
      $region58: #{mask_vector_quantize.1} parent=47 // pred_check_branch
        %1602 = sbr.rel (%p1600) target = $region60
      $region59: #{mask_vector_quantize.1} parent=47 // pred_region
        %s1603 = smul.u32 2, %s24
        %p1604 = scmp.lt.s32.totalorder %s23, 1
        %s1605 = scalar_select %p1604, %s23, 1
        %p1606 = scmp.lt.s32.totalorder %s1603, 1
        %s1607 = scalar_select %p1606, %s1603, 1
        %s1608 = smul.addr %s1605, 2
        %s1609 = sadd.s32 %s1607, %s1608
        %s1610 = scalar_lea.vmem %s5, %s1609
      $region60: #{mask_vector_quantize.1} parent=47 // pred_fallthru
        _
    $region48: #{mask_vector_quantize.1} parent=5 // pred_fallthru
      _
  $region6: #{mask_vector_quantize.1} parent=0 // loop_footer
    %s16 = sadd.s32 1, %s12
  $region7: #{mask_vector_quantize.1} parent=0 // loop_footer_branch
    %11 = sbr.rel target = $region3
  $region8: #{mask_vector_quantize.1} parent=0 // loop_exit
    _

</llo_original>
